<compile_context>
chip_gen: v6e
topology: v6e:2x2x1
jax: 0.10.0
libtpu: 0.0.40
codegen_flags: <defaults>
</compile_context>

<pallas_src>
import functools

import jax
import jax.numpy as jnp
from jax.experimental import pallas as pl
from jax.experimental.pallas import tpu as pltpu

EMBED = 64  # fixed by nn.Linear(64, 64) in the reference module


# ----------------------------------------------------------------------------
# Fused all-layers kernel: L resident in VMEM, grid iterates over layers.
# ----------------------------------------------------------------------------
def _ngcf_fused_kernel(lap_ref, x0_ref, w_ref, b2_ref, o_ref, x_ref):
    @pl.when(pl.program_id(0) == 0)
    def _():
        x_ref[...] = x0_ref[...]                       # layer-0 embedding carry

    x = x_ref[...]                                     # (N, E) f32, VMEM carry
    z = (x + x * x).astype(lap_ref.dtype)              # bf16 for the MXU
    h = jnp.dot(lap_ref[...], z, preferred_element_type=jnp.float32) + x
    y = jnp.dot(h, w_ref[...], preferred_element_type=jnp.float32) + b2_ref[...]
    y = jnp.where(y >= 0.0, y, 0.2 * y)                # LeakyReLU(0.2)
    ss = jnp.sum(y * y, axis=1, keepdims=True)
    y = y * jax.lax.rsqrt(jnp.maximum(ss, 1e-24))      # F.normalize(p=2, dim=1)
    x_ref[...] = y                                     # carry to next layer
    o_ref[...] = y


def ngcf_fused(lap_bf16, x0, w_stack, b2_stack, *, vmem_limit):
    n_pad, e = x0.shape
    layer_size = w_stack.shape[0]
    flops = layer_size * (2 * n_pad * n_pad * e + 2 * n_pad * e * e)
    bytes_acc = (n_pad * n_pad * 2 + n_pad * e * 4
                 + layer_size * n_pad * e * 4 + layer_size * e * e * 4)
    return pl.pallas_call(
        _ngcf_fused_kernel,
        out_shape=jax.ShapeDtypeStruct((layer_size, n_pad, e), jnp.float32),
        grid_spec=pltpu.PrefetchScalarGridSpec(
            num_scalar_prefetch=0,
            grid=(layer_size,),
            in_specs=[
                pl.BlockSpec((n_pad, n_pad), lambda l: (0, 0)),  # L, DMA'd once
                pl.BlockSpec((n_pad, e), lambda l: (0, 0)),      # X0, DMA'd once
                pl.BlockSpec((None, e, e), lambda l: (l, 0, 0)),  # W_l
                pl.BlockSpec((None, 1, e), lambda l: (l, 0, 0)),  # 2*b_l
            ],
            out_specs=pl.BlockSpec((None, n_pad, e), lambda l: (l, 0, 0)),
            scratch_shapes=[pltpu.VMEM((n_pad, e), jnp.float32)],  # carry
        ),
        compiler_params=pltpu.CompilerParams(
            dimension_semantics=("arbitrary",),
            vmem_limit_bytes=vmem_limit,
        ),
        cost_estimate=pl.CostEstimate(flops=flops, transcendentals=0,
                                      bytes_accessed=bytes_acc),
    )(lap_bf16, x0, w_stack, b2_stack)


# ----------------------------------------------------------------------------
# Tiled per-layer kernel: 2-D (rows, k) grid, f32 accumulator, resident bf16 Z.
# ----------------------------------------------------------------------------
def _ngcf_layer_kernel(lap_ref, z_ref, xi_ref, w_ref, b2_ref, o_ref, acc_ref,
                       *, tk, z_resident):
    k = pl.program_id(1)

    @pl.when(k == 0)
    def _():
        # Identity term of (L + I) @ X, folded into the accumulator init.
        acc_ref[...] = xi_ref[...]

    if z_resident:
        off = pl.multiple_of(k * tk, tk)
        zk = z_ref[pl.ds(off, tk), :]                  # slice of resident bf16 Z
    else:
        zk = z_ref[...]                                # streamed bf16 Z tile
    acc_ref[...] += jnp.dot(lap_ref[...], zk, preferred_element_type=jnp.float32)

    @pl.when(k == pl.num_programs(1) - 1)
    def _():
        y = jnp.dot(acc_ref[...], w_ref[...], preferred_element_type=jnp.float32)
        y = y + b2_ref[...]                            # shared (W, b): bias twice
        y = jnp.where(y >= 0.0, y, 0.2 * y)            # LeakyReLU(0.2)
        ss = jnp.sum(y * y, axis=1, keepdims=True)
        o_ref[...] = y * jax.lax.rsqrt(jnp.maximum(ss, 1e-24))


def ngcf_layer_tiled(lap_bf16, x, w, b2, *, tm, tk, z_resident, vmem_limit):
    n_pad, e = x.shape
    z = (x + x * x).astype(lap_bf16.dtype)             # precomputed once, bf16
    grid = (n_pad // tm, n_pad // tk)
    if z_resident:
        z_spec = pl.BlockSpec((n_pad, e), lambda i, k: (0, 0))   # DMA'd once
    else:
        z_spec = pl.BlockSpec((tk, e), lambda i, k: (k, 0))
    kernel = functools.partial(_ngcf_layer_kernel, tk=tk, z_resident=z_resident)
    flops = 2 * n_pad * n_pad * e + 2 * n_pad * e * e
    bytes_acc = n_pad * n_pad * 2 + n_pad * e * (2 + 4 + 4) + e * e * 4
    return pl.pallas_call(
        kernel,
        out_shape=jax.ShapeDtypeStruct((n_pad, e), jnp.float32),
        grid_spec=pltpu.PrefetchScalarGridSpec(
            num_scalar_prefetch=0,
            grid=grid,
            in_specs=[
                pl.BlockSpec((tm, tk), lambda i, k: (i, k)),   # L tile (bf16)
                z_spec,                                        # Z = X + X*X (bf16)
                pl.BlockSpec((tm, e), lambda i, k: (i, 0)),    # X rows for "+X"
                pl.BlockSpec((e, e), lambda i, k: (0, 0)),     # W (resident)
                pl.BlockSpec((1, e), lambda i, k: (0, 0)),     # 2*b (resident)
            ],
            out_specs=pl.BlockSpec((tm, e), lambda i, k: (i, 0)),
            scratch_shapes=[pltpu.VMEM((tm, e), jnp.float32)],
        ),
        compiler_params=pltpu.CompilerParams(
            dimension_semantics=("parallel", "arbitrary"),
            vmem_limit_bytes=vmem_limit,
        ),
        cost_estimate=pl.CostEstimate(flops=flops, transcendentals=0,
                                      bytes_accessed=bytes_acc),
    )(lap_bf16, z, x, w, b2)


# ----------------------------------------------------------------------------
# Planning: generation-aware VMEM / tile selection, hoisted L cast+pad.
# ----------------------------------------------------------------------------
def _round_up(x, m):
    return ((x + m - 1) // m) * m


def _device_budget():
    vmem = 64 * 1024 * 1024
    try:
        info = pltpu.get_tpu_info()
        vmem = int(getattr(info, "vmem_capacity_bytes", vmem))
    except Exception:
        pass
    if vmem >= 96 * 1024 * 1024:
        # v5e / v6e: 128 MiB physical VMEM — use most of it.
        return {"vmem_limit": 100 * 1024 * 1024, "max_tile": 2048}
    # v7x: 64 MiB per TensorCore — keep the footprint conservative.
    return {"vmem_limit": 48 * 1024 * 1024, "max_tile": 2048}


def _choose_tiling(n, max_tile):
    """Pick (n_pad, tile) with tile | n_pad, tile <= max_tile, small padding."""
    if n <= max_tile:
        n_pad = _round_up(n, 8)
        return n_pad, n_pad
    for gran in (256, 512, 1024, 2048):
        gran = min(gran, max_tile)
        n_pad = _round_up(n, gran)
        t = (max_tile // gran) * gran
        while n_pad % t != 0:
            t -= gran
        if t >= min(1024, max_tile) or gran >= max_tile:
            return n_pad, t
    return _round_up(n, max_tile), max_tile


def _fused_vmem_bytes(n_pad, e):
    lap = 2 * n_pad * n_pad * 2          # conservatively assume double-buffered
    vecs = 9 * n_pad * e * 4             # x0, carry, out (x2), z/h/y temporaries
    return lap + vecs + (2 << 20)


def _tiled_vmem_bytes(n_pad, tm, tk, e, z_resident):
    lap = 2 * tm * tk * 2
    z = 2 * (n_pad if z_resident else tk) * e * 2
    vecs = (2 + 2 + 1) * tm * e * 4      # xi, out (double-buffered), acc
    return lap + z + vecs + 2 * e * e * 4 + (2 << 20)


def _pad_cast_laplacian(norm_laplacian, n_pad):
    lap = norm_laplacian.astype(jnp.bfloat16)          # single N x N operand
    n = norm_laplacian.shape[0]
    if n_pad != n:
        lap = jnp.pad(lap, ((0, n_pad - n), (0, n_pad - n)))
    return lap


def make_plan(norm_laplacian, layer_size, embed, *, max_tile=None, force_path=None):
    """One-time plan: path selection + hoisted/cached bf16 padded Laplacian."""
    n = norm_laplacian.shape[0]
    budget = _device_budget()
    vmem_limit = budget["vmem_limit"]
    if max_tile is None:
        max_tile = budget["max_tile"]

    n_pad_fused = _round_up(n, 8)
    use_fused = _fused_vmem_bytes(n_pad_fused, embed) <= int(vmem_limit * 0.85)
    if force_path == "fused":
        use_fused = True
    elif force_path == "tiled":
        use_fused = False

    if use_fused:
        return {
            "path": "fused", "n": n, "n_pad": n_pad_fused,
            "lap": _pad_cast_laplacian(norm_laplacian, n_pad_fused),
            "vmem_limit": vmem_limit,
        }

    n_pad, tile = _choose_tiling(n, max_tile)
    tm = tk = tile
    z_resident = (_tiled_vmem_bytes(n_pad, tm, tk, embed, True)
                  <= int(vmem_limit * 0.85))
    return {
        "path": "tiled", "n": n, "n_pad": n_pad, "tm": tm, "tk": tk,
        "z_resident": z_resident,
        "lap": _pad_cast_laplacian(norm_laplacian, n_pad),
        "vmem_limit": vmem_limit,
    }


# ----------------------------------------------------------------------------
# Parameters and forward.
# ----------------------------------------------------------------------------
def xavier_uniform(key, shape):
    fan_in, fan_out = shape[-2], shape[-1]
    bound = (6.0 / (fan_in + fan_out)) ** 0.5
    return jax.random.uniform(key, shape, jnp.float32, -bound, bound)


def init_params(key, num_users, num_items, embed_size, layer_size):
    keys = jax.random.split(key, 2 + layer_size)
    params = {
        "user_emb": xavier_uniform(keys[0], (num_users, embed_size)),
        "item_emb": xavier_uniform(keys[1], (num_items, embed_size)),
        "layers": [],
    }
    for l in range(layer_size):
        w = xavier_uniform(keys[2 + l], (64, 64))
        b = jnp.full((64,), 0.01, jnp.float32)          # bias.data.fill_(0.01)
        params["layers"].append((w, b))
    return params


def ngcf_forward(params, plan, users, pos_items, neg_items, num_users):
    """Eval-mode forward (use_dropout=False). eye_matrix is folded in exactly."""
    e = params["user_emb"].shape[1]
    x0 = jnp.concatenate([params["user_emb"], params["item_emb"]],
                         axis=0).astype(jnp.float32)
    n = plan["n"]
    n_pad = plan["n_pad"]
    if n_pad != n:
        x0 = jnp.pad(x0, ((0, n_pad - n), (0, 0)))

    if plan["path"] == "fused":
        w_stack = jnp.stack([w for (w, _) in params["layers"]], axis=0)
        b2_stack = jnp.stack([(2.0 * b).reshape(1, e) for (_, b) in params["layers"]],
                             axis=0)                    # bias enters twice
        outs = ngcf_fused(plan["lap"], x0, w_stack, b2_stack,
                          vmem_limit=plan["vmem_limit"])
        embs = [x0[:n]] + [outs[l, :n] for l in range(outs.shape[0])]
        all_emb = jnp.concatenate(embs, axis=1)
    else:
        prev = x0
        embs = [x0]
        for (w, b) in params["layers"]:
            b2 = (2.0 * b).reshape(1, e)
            prev = ngcf_layer_tiled(plan["lap"], prev, w, b2,
                                    tm=plan["tm"], tk=plan["tk"],
                                    z_resident=plan["z_resident"],
                                    vmem_limit=plan["vmem_limit"])
            embs.append(prev)
        all_emb = jnp.concatenate(embs, axis=1)[:n]

    user_embeddings = all_emb[:num_users, :]
    item_embeddings = all_emb[num_users:, :]
    return (user_embeddings[users, :],
            item_embeddings[pos_items, :],
            item_embeddings[neg_items, :])


def ngcf_reference(params, lap, users, pos_items, neg_items, num_users):
    """Pure-JAX f32 replica of the PyTorch forward (eval mode)."""
    x = jnp.concatenate([params["user_emb"], params["item_emb"]], axis=0)
    embs = [x]
    for (w, b) in params["layers"]:
        first = jnp.dot(jnp.dot(lap, x) + x, w) + b
        second = jnp.dot(jnp.dot(lap, x * x), w) + b
        y = first + second
        y = jnp.where(y >= 0.0, y, 0.2 * y)
        nrm = jnp.maximum(jnp.sqrt(jnp.sum(y * y, axis=1, keepdims=True)), 1e-12)
        x = y / nrm
        embs.append(x)
    all_emb = jnp.concatenate(embs, axis=1)
    ue, ie = all_emb[:num_users, :], all_emb[num_users:, :]
    return ue[users, :], ie[pos_items, :], ie[neg_items, :]


if __name__ == "__main__":
    num_users, num_items = 100, 156
    n = num_users + num_items                            # 256
    layer_size = 3

    key = jax.random.PRNGKey(0)
    k_param, k_adj = jax.random.split(key)

    params = init_params(k_param, num_users, num_items, EMBED, layer_size)

    # Deterministic synthetic normalized-laplacian-like matrix (dense stand-in
    # for the scipy coo_matrix).
    adj = (jax.random.uniform(k_adj, (n, n)) > 0.9).astype(jnp.float32)
    adj = jnp.maximum(adj, adj.T)                        # symmetric
    deg = jnp.maximum(adj.sum(axis=1, keepdims=True), 1.0)
    norm_laplacian = adj / jnp.sqrt(deg) / jnp.sqrt(deg.T)

    users = jnp.array([0, 3, 7, 42], dtype=jnp.int32)
    pos_items = jnp.array([1, 4, 9, 120], dtype=jnp.int32)
    neg_items = jnp.array([2, 5, 11, 77], dtype=jnp.int32)

    ref = ngcf_reference(params, norm_laplacian, users, pos_items, neg_items,
                         num_users)

    # Path 1: fused all-layers kernel (bf16 L resident in VMEM, one pallas_call).
    plan_f = make_plan(norm_laplacian, layer_size, EMBED, force_path="fused")
    out_f = ngcf_forward(params, plan_f, users, pos_items, neg_items, num_users)

    # Path 2: tiled per-layer kernel; max_tile=128 forces a real 2x2 (rows, k)
    # grid so the accumulator / epilogue / resident-Z slicing path is exercised.
    plan_t = make_plan(norm_laplacian, layer_size, EMBED, max_tile=128,
                       force_path="tiled")
    out_t = ngcf_forward(params, plan_t, users, pos_items, neg_items, num_users)

    jax.block_until_ready((out_f, out_t, ref))

    expected_dim = EMBED * (layer_size + 1)
    for outs in (out_f, out_t):
        for arr in outs:
            assert arr.shape == (4, expected_dim)
            assert bool(jnp.all(jnp.isfinite(arr)))

    # bf16 L / Z vs f32 reference: bounded drift.
    for a, b in zip(out_f, ref):
        assert float(jnp.max(jnp.abs(a - b))) < 0.06
    for a, b in zip(out_t, ref):
        assert float(jnp.max(jnp.abs(a - b))) < 0.06
    # The two kernel paths compute the same bf16 algebra.
    for a, b in zip(out_f, out_t):
        assert float(jnp.max(jnp.abs(a - b))) < 1e-2

    print("KERNEL_OK")
</pallas_src>

<mosaic_0001>
module attributes {stable_mosaic.version = 11 : i64} {
  func.func @_ngcf_fused_kernel(%arg0: i32, %arg1: memref<256x256xbf16, #tpu.memory_space<vmem>>, %arg2: memref<256x64xf32, #tpu.memory_space<vmem>>, %arg3: memref<1x64x64xf32, #tpu.memory_space<vmem>>, %arg4: memref<1x1x64xf32, #tpu.memory_space<vmem>>, %arg5: memref<1x256x64xf32, #tpu.memory_space<vmem>>, %arg6: memref<256x64xf32, #tpu.memory_space<vmem>>) attributes {dimension_semantics = [#tpu.dimension_semantics<arbitrary>], iteration_bounds = array<i64: 3>, scalar_prefetch = 0 : i64, scratch_operands = 1 : i64, tpu.core_type = #tpu.core_type<tc>, window_params = [{pipeline_mode = #tpu.pipeline_mode<synchronous>, transform_indices = @transform_0, window_bounds = array<i64: 256, 256>}, {pipeline_mode = #tpu.pipeline_mode<synchronous>, transform_indices = @transform_1, window_bounds = array<i64: 256, 64>}, {transform_indices = @transform_2, window_bounds = array<i64: 1, 64, 64>}, {transform_indices = @transform_3, window_bounds = array<i64: 1, 1, 64>}, {transform_indices = @transform_4, window_bounds = array<i64: 1, 256, 64>}]} {
    %c0_i32 = arith.constant 0 : i32
    %0 = arith.cmpi eq, %arg0, %c0_i32 : i32
    %1 = arith.extui %0 : i1 to i32
    %c0_i32_0 = arith.constant 0 : i32
    %2 = arith.cmpi ne, %1, %c0_i32_0 : i32
    scf.if %2 {
      %c0_20 = arith.constant 0 : index
      %c0_21 = arith.constant 0 : index
      %34 = vector.load %arg2[%c0_20, %c0_21] : memref<256x64xf32, #tpu.memory_space<vmem>>, vector<256x64xf32>
      %c0_22 = arith.constant 0 : index
      %c0_23 = arith.constant 0 : index
      %35 = vector.load %arg6[%c0_22, %c0_23] : memref<256x64xf32, #tpu.memory_space<vmem>>, vector<256x64xf32>
      tpu.vector_store %arg6[%c0_22, %c0_23], %34 {strides = array<i32>} : memref<256x64xf32, #tpu.memory_space<vmem>>, vector<256x64xf32>,
    } else {
    }
    %c0 = arith.constant 0 : index
    %c0_1 = arith.constant 0 : index
    %3 = vector.load %arg6[%c0, %c0_1] : memref<256x64xf32, #tpu.memory_space<vmem>>, vector<256x64xf32>
    %4 = arith.mulf %3, %3 : vector<256x64xf32>
    %5 = arith.addf %3, %4 : vector<256x64xf32>
    %6 = arith.truncf %5 : vector<256x64xf32> to vector<256x64xbf16>
    %c0_2 = arith.constant 0 : index
    %c0_3 = arith.constant 0 : index
    %7 = vector.load %arg1[%c0_2, %c0_3] : memref<256x256xbf16, #tpu.memory_space<vmem>>, vector<256x256xbf16>
    %cst = arith.constant dense<0.000000e+00> : vector<256x64xf32>
    %8 = tpu.matmul %7, %6, %cst {dimension_numbers = #tpu.dot_dimension_numbers<[1], [0], [0], [1], [0, 0, 1, 1], [], []>} : vector<256x256xbf16>, vector<256x64xbf16>, vector<256x64xf32> -> vector<256x64xf32>
    %9 = arith.addf %8, %3 : vector<256x64xf32>
    %c0_4 = arith.constant 0 : index
    %c0_5 = arith.constant 0 : index
    %c0_6 = arith.constant 0 : index
    %10 = vector.load %arg3[%c0_4, %c0_5, %c0_6] : memref<1x64x64xf32, #tpu.memory_space<vmem>>, vector<1x64x64xf32>
    %11 = vector.shape_cast %10 : vector<1x64x64xf32> to vector<64x64xf32>
    %cst_7 = arith.constant dense<0.000000e+00> : vector<256x64xf32>
    %12 = tpu.matmul %9, %11, %cst_7 {dimension_numbers = #tpu.dot_dimension_numbers<[1], [0], [0], [1], [0, 0, 1, 1], [], []>} : vector<256x64xf32>, vector<64x64xf32>, vector<256x64xf32> -> vector<256x64xf32>
    %c0_8 = arith.constant 0 : index
    %c0_9 = arith.constant 0 : index
    %c0_10 = arith.constant 0 : index
    %13 = vector.load %arg4[%c0_8, %c0_9, %c0_10] : memref<1x1x64xf32, #tpu.memory_space<vmem>>, vector<1x1x64xf32>
    %14 = vector.shape_cast %13 : vector<1x1x64xf32> to vector<1x64xf32>
    %15 = vector.broadcast %14 : vector<1x64xf32> to vector<256x64xf32>
    %16 = arith.addf %12, %15 : vector<256x64xf32>
    %cst_11 = arith.constant 0.000000e+00 : f32
    %17 = vector.broadcast %cst_11 : f32 to vector<256x64xf32>
    %18 = arith.cmpf oge, %16, %17 : vector<256x64xf32>
    %cst_12 = arith.constant 2.000000e-01 : f32
    %19 = vector.broadcast %cst_12 : f32 to vector<256x64xf32>
    %20 = arith.mulf %19, %16 : vector<256x64xf32>
    %21 = arith.select %18, %16, %20 : vector<256x64xi1>, vector<256x64xf32>
    %22 = arith.mulf %21, %21 : vector<256x64xf32>
    %cst_13 = arith.constant dense<0.000000e+00> : vector<256xf32>
    %23 = vector.multi_reduction <add>, %22, %cst_13 [1] : vector<256x64xf32> to vector<256xf32>
    %24 = vector.shape_cast %23 : vector<256xf32> to vector<256x1xf32>
    %cst_14 = arith.constant 1.000000e-24 : f32
    %25 = vector.broadcast %cst_14 : f32 to vector<256x1xf32>
    %26 = arith.maximumf %24, %25 : vector<256x1xf32>
    %27 = math.rsqrt %26 : vector<256x1xf32>
    %28 = vector.broadcast %27 : vector<256x1xf32> to vector<256x64xf32>
    %29 = arith.mulf %21, %28 : vector<256x64xf32>
    %c0_15 = arith.constant 0 : index
    %c0_16 = arith.constant 0 : index
    %30 = vector.load %arg6[%c0_15, %c0_16] : memref<256x64xf32, #tpu.memory_space<vmem>>, vector<256x64xf32>
    tpu.vector_store %arg6[%c0_15, %c0_16], %29 {strides = array<i32>} : memref<256x64xf32, #tpu.memory_space<vmem>>, vector<256x64xf32>,
    %c0_17 = arith.constant 0 : index
    %c0_18 = arith.constant 0 : index
    %c0_19 = arith.constant 0 : index
    %31 = vector.load %arg5[%c0_17, %c0_18, %c0_19] : memref<1x256x64xf32, #tpu.memory_space<vmem>>, vector<1x256x64xf32>
    %32 = vector.shape_cast %31 : vector<1x256x64xf32> to vector<256x64xf32>
    %33 = vector.shape_cast %29 : vector<256x64xf32> to vector<1x256x64xf32>
    tpu.vector_store %arg5[%c0_17, %c0_18, %c0_19], %33 {strides = array<i32>} : memref<1x256x64xf32, #tpu.memory_space<vmem>>, vector<1x256x64xf32>,
    return
  }
  func.func @transform_0(%arg0: i32) -> (i32, i32) {
    %c0_i32 = arith.constant 0 : i32
    %c0_i32_0 = arith.constant 0 : i32
    %c0_i32_1 = arith.constant 0 : i32
    return %c0_i32, %c0_i32_0 : i32, i32
  }
  func.func @transform_1(%arg0: i32) -> (i32, i32) {
    %c0_i32 = arith.constant 0 : i32
    %c0_i32_0 = arith.constant 0 : i32
    %c0_i32_1 = arith.constant 0 : i32
    return %c0_i32, %c0_i32_0 : i32, i32
  }
  func.func @transform_2(%arg0: i32) -> (i32, i32, i32) {
    %c0_i32 = arith.constant 0 : i32
    %c0_i32_0 = arith.constant 0 : i32
    %c0_i32_1 = arith.constant 0 : i32
    return %arg0, %c0_i32, %c0_i32_0 : i32, i32, i32
  }
  func.func @transform_3(%arg0: i32) -> (i32, i32, i32) {
    %c0_i32 = arith.constant 0 : i32
    %c0_i32_0 = arith.constant 0 : i32
    %c0_i32_1 = arith.constant 0 : i32
    return %arg0, %c0_i32, %c0_i32_0 : i32, i32, i32
  }
  func.func @transform_4(%arg0: i32) -> (i32, i32, i32) {
    %c0_i32 = arith.constant 0 : i32
    %c0_i32_0 = arith.constant 0 : i32
    %c0_i32_1 = arith.constant 0 : i32
    return %arg0, %c0_i32, %c0_i32_0 : i32, i32, i32
  }
}

</mosaic_0001>

<llo_original>
// kernel: tpu_custom_call.1
$region0: #{tpu_custom_call.1}
  #allocation0 [shape = 'u32[]', space=smem, size = 0x4, offset = 0x4, fixed_abs, tag = 'smem constant byte address 0x4 - core index']
  #allocation1 [shape = 'u32[144,128]{1,0:T(1,128)}', space=vmem, size = 0x12000, scoped, tag = 'internal scratch']
  #allocation2 [shape = 'f32[256,64]{1,0:T(8,128)}', space=vmem, size = 0x20000, scoped, tag = 'scratch operand']
  %s0 = inlined_call_operand.vmem [shape: bf16[256,256], index: 0, kind: input, shape index: {}]
  %s1 = inlined_call_operand.vmem [shape: f32[256,64], index: 1, kind: input, shape index: {}]
  %s2 = inlined_call_operand.hbm [shape: f32[3,64,64], index: 2, kind: input, shape index: {}]
  %s3 = inlined_call_operand.vmem [shape: f32[3,1,64], index: 3, kind: input, shape index: {}]
  %s4 = inlined_call_operand.vmem [shape: f32[3,256,64], index: 4, kind: output, shape index: {}]
  %s5 = sld [smem:[#allocation0]]
  $region57: #{tpu_custom_call.1} parent=0
    _
  %s7 = ssub.s32 1, %s5
  %s8 = scalar_select 0, %s7, %s5
  $region1: #{tpu_custom_call.1} parent=0
    #allocation3 [shape = 'u8[65536]{0}', space=vmem, size = 0x10000, scoped, tag = 'input window, operand 2']
    #allocation4 [shape = 's32[2]{0}', space=sflag, size = 0x8, scoped, tag = 'scoped memory for tpu_custom_call.1']
    %9 = vsyncpa [#allocation4], 0
    %s10 = scalar_lea.sflag [#allocation4], 1
    %11 = vsyncpa %s10, 0
    loop: start=0, step=1, limit=5
    $region2: #{tpu_custom_call.1} parent=1 // loop_pre_header
      _
    $region3: #{tpu_custom_call.1} parent=1 // loop_header
      %s13 = sphi 0, %s17
      %p14 = scmp.ge.s32.totalorder %s13, 5
      %s21 = sphi 0, %s21
      %s23 = sphi 0, %s21
      %s24 = sphi 0, %s23
      %s38 = sphi 0, %s24
      %s42 = sphi 0, %s42
      %s44 = sphi 0, %s42
      %s45 = sphi 0, %s44
      %s59 = sphi 0, %s45
      %s65 = sphi 0, %s67
      %s68 = sphi 0, %s65
      %s69 = sphi 0, %s68
      %s85 = sphi 0, %s69
      %s91 = sphi 0, %s93
      %s94 = sphi 0, %s91
      %s95 = sphi 0, %s94
      %s111 = sphi 0, %s95
      %s117 = sphi 0, %s119
      %s120 = sphi 0, %s117
      %s121 = sphi 0, %s120
      %s137 = sphi 0, %s121
    $region4: #{tpu_custom_call.1} parent=1 // loop_header_branch
      %16 = sbr.rel (%p14) target = $region8
    $region5: #{tpu_custom_call.1} parent=1 // loop_body
      %s18 = ssub.s32 %s13, 1
      %s19 = ssub.s32 %s13, 2
      %s20 = sadd.s32 %s13, 1
      %s22 = sadd.s32 %s21, 1
      %p25 = scmp.eq.s32.totalorder %s13, 2
      %p26 = scmp.ne.s32.totalorder %s21, %s23
      %p27 = scmp.eq.s32.totalorder %s13, 0
      %p28 = por %p26, %p27
      %p29 = scmp.ne.s32.totalorder %s21, %s23
      %p30 = scmp.eq.s32.totalorder %s18, 2
      %p31 = por %p29, %p30
      %p32 = scmp.ne.s32.totalorder %s23, %s24
      %p33 = scmp.eq.s32.totalorder %s18, 0
      %p34 = por %p32, %p33
      %p35 = scmp.ne.s32.totalorder %s23, %s24
      %p36 = scmp.eq.s32.totalorder %s19, 2
      %p37 = por %p35, %p36
      %p39 = scmp.ne.s32.totalorder %s24, %s38
      %p40 = scmp.eq.s32.totalorder %s19, 0
      %p41 = por %p39, %p40
      %s43 = sadd.s32 %s42, 1
      %p46 = scmp.eq.s32.totalorder %s13, 2
      %p47 = scmp.ne.s32.totalorder %s42, %s44
      %p48 = scmp.eq.s32.totalorder %s13, 0
      %p49 = por %p47, %p48
      %p50 = scmp.ne.s32.totalorder %s42, %s44
      %p51 = scmp.eq.s32.totalorder %s18, 2
      %p52 = por %p50, %p51
      %p53 = scmp.ne.s32.totalorder %s44, %s45
      %p54 = scmp.eq.s32.totalorder %s18, 0
      %p55 = por %p53, %p54
      %p56 = scmp.ne.s32.totalorder %s44, %s45
      %p57 = scmp.eq.s32.totalorder %s19, 2
      %p58 = por %p56, %p57
      %p60 = scmp.ne.s32.totalorder %s45, %s59
      %p61 = scmp.eq.s32.totalorder %s19, 0
      %p62 = por %p60, %p61
      %s63 = ssub.s32 %s13, %s20
      %p64 = scmp.eq.s32.totalorder %s63, 0
      %s66 = sadd.s32 %s65, 1
      %s67 = scalar_select %p64, %s65, %s66
      %p70 = pneg %p64
      %p71 = scmp.eq.s32.totalorder %s13, 2
      %p72 = por %p70, %p71
      %p73 = scmp.ne.s32.totalorder %s65, %s68
      %p74 = scmp.eq.s32.totalorder %s13, 0
      %p75 = por %p73, %p74
      %p76 = scmp.ne.s32.totalorder %s65, %s68
      %p77 = scmp.eq.s32.totalorder %s18, 2
      %p78 = por %p76, %p77
      %p79 = scmp.ne.s32.totalorder %s68, %s69
      %p80 = scmp.eq.s32.totalorder %s18, 0
      %p81 = por %p79, %p80
      %p82 = scmp.ne.s32.totalorder %s68, %s69
      %p83 = scmp.eq.s32.totalorder %s19, 2
      %p84 = por %p82, %p83
      %p86 = scmp.ne.s32.totalorder %s69, %s85
      %p87 = scmp.eq.s32.totalorder %s19, 0
      %p88 = por %p86, %p87
      %s89 = ssub.s32 %s13, %s20
      %p90 = scmp.eq.s32.totalorder %s89, 0
      %s92 = sadd.s32 %s91, 1
      %s93 = scalar_select %p90, %s91, %s92
      %p96 = pneg %p90
      %p97 = scmp.eq.s32.totalorder %s13, 2
      %p98 = por %p96, %p97
      %p99 = scmp.ne.s32.totalorder %s91, %s94
      %p100 = scmp.eq.s32.totalorder %s13, 0
      %p101 = por %p99, %p100
      %p102 = scmp.ne.s32.totalorder %s91, %s94
      %p103 = scmp.eq.s32.totalorder %s18, 2
      %p104 = por %p102, %p103
      %p105 = scmp.ne.s32.totalorder %s94, %s95
      %p106 = scmp.eq.s32.totalorder %s18, 0
      %p107 = por %p105, %p106
      %p108 = scmp.ne.s32.totalorder %s94, %s95
      %p109 = scmp.eq.s32.totalorder %s19, 2
      %p110 = por %p108, %p109
      %p112 = scmp.ne.s32.totalorder %s95, %s111
      %p113 = scmp.eq.s32.totalorder %s19, 0
      %p114 = por %p112, %p113
      %s115 = ssub.s32 %s13, %s20
      %p116 = scmp.eq.s32.totalorder %s115, 0
      %s118 = sadd.s32 %s117, 1
      %s119 = scalar_select %p116, %s117, %s118
      %p122 = pneg %p116
      %p123 = scmp.eq.s32.totalorder %s13, 2
      %p124 = por %p122, %p123
      %p125 = scmp.ne.s32.totalorder %s117, %s120
      %p126 = scmp.eq.s32.totalorder %s13, 0
      %p127 = por %p125, %p126
      %p128 = scmp.ne.s32.totalorder %s117, %s120
      %p129 = scmp.eq.s32.totalorder %s18, 2
      %p130 = por %p128, %p129
      %p131 = scmp.ne.s32.totalorder %s120, %s121
      %p132 = scmp.eq.s32.totalorder %s18, 0
      %p133 = por %p131, %p132
      %p134 = scmp.ne.s32.totalorder %s120, %s121
      %p135 = scmp.eq.s32.totalorder %s19, 2
      %p136 = por %p134, %p135
      %p138 = scmp.ne.s32.totalorder %s121, %s137
      %p139 = scmp.eq.s32.totalorder %s19, 0
      %p140 = por %p138, %p139
      %p141 = scmp.le.s32.totalorder 1, %s13
      %p142 = scmp.lt.s32.totalorder %s13, 4
      %p143 = pnand %p141, %p142
      %p144 = pneg %p143
      // Predicated region
      $region9: #{tpu_custom_call.1} parent=5 // pred_check
        _
      $region10: #{tpu_custom_call.1} parent=5 // pred_check_branch
        %146 = sbr.rel (%p143) target = $region12
      $region11: #{tpu_custom_call.1} parent=5 // pred_region
        %s147 = ssub.s32 %s13, 1
        // Predicated region
        $region13: #{tpu_custom_call.1} parent=11 // pred_check
          %p148 = pneg %p34
        $region14: #{tpu_custom_call.1} parent=11 // pred_check_branch
          %150 = sbr.rel (%p148) target = $region16
        $region15: #{tpu_custom_call.1} parent=11 // pred_region
          _
        $region16: #{tpu_custom_call.1} parent=11 // pred_fallthru
          _
        // Predicated region
        $region17: #{tpu_custom_call.1} parent=11 // pred_check
          %p151 = pneg %p55
        $region18: #{tpu_custom_call.1} parent=11 // pred_check_branch
          %153 = sbr.rel (%p151) target = $region20
        $region19: #{tpu_custom_call.1} parent=11 // pred_region
          _
        $region20: #{tpu_custom_call.1} parent=11 // pred_fallthru
          _
      $region12: #{tpu_custom_call.1} parent=5 // pred_fallthru
        _
      %p154 = scmp.lt.s32.totalorder %s13, 3
      // Predicated region
      $region21: #{tpu_custom_call.1} parent=5 // pred_check
        %p155 = pneg %p154
      $region22: #{tpu_custom_call.1} parent=5 // pred_check_branch
        %157 = sbr.rel (%p155) target = $region24
      $region23: #{tpu_custom_call.1} parent=5 // pred_region
        // Predicated region
        $region25: #{tpu_custom_call.1} parent=23 // pred_check
          %p158 = pneg %p75
        $region26: #{tpu_custom_call.1} parent=23 // pred_check_branch
          %160 = sbr.rel (%p158) target = $region28
        $region27: #{tpu_custom_call.1} parent=23 // pred_region
          %s161 = sand.u32 %s65, 1
          %s162 = scalar_lea.sflag [#allocation4], %s161
          %s163 = sand.u32 %s65, 1
          %s164 = smul.addr %s163, 64
          %s165 = scalar_lea.vmem [#allocation3], %s164
          %s167 = ssub.s32 1024, 1024
          %168 = vsyncadd %s162, %s167
          %s169 = smul.addr %s13, 8
          %s170 = smul.addr %s169, 128
          %s171 = scalar_lea.hbm %s2, %s170
          %s172 = sshll.u32 %s165, 4
          %s173 = int_to_ptr.vmem [resolvable:$true] %s172
          %178 = dma.hbm_to_vmem [thread:$0]  %s171, 1024, %s173, %s162, 128, 128, 8
        $region28: #{tpu_custom_call.1} parent=23 // pred_fallthru
          _
        // Predicated region
        $region29: #{tpu_custom_call.1} parent=23 // pred_check
          %p179 = pneg %p101
        $region30: #{tpu_custom_call.1} parent=23 // pred_check_branch
          %181 = sbr.rel (%p179) target = $region32
        $region31: #{tpu_custom_call.1} parent=23 // pred_region
          %p182 = scmp.lt.s32.totalorder %s13, 2
          %s183 = scalar_select %p182, %s13, 2
          %s184 = scalar_lea.vmem %s3, %s183
        $region32: #{tpu_custom_call.1} parent=23 // pred_fallthru
          _
      $region24: #{tpu_custom_call.1} parent=5 // pred_fallthru
        _
      %p185 = scmp.le.s32.totalorder 1, %s13
      %p186 = scmp.lt.s32.totalorder %s13, 4
      %p187 = pnand %p185, %p186
      %p188 = pneg %p187
      // Predicated region
      $region33: #{tpu_custom_call.1} parent=5 // pred_check
        _
      $region34: #{tpu_custom_call.1} parent=5 // pred_check_branch
        %190 = sbr.rel (%p187) target = $region36
      $region35: #{tpu_custom_call.1} parent=5 // pred_region
        %s191 = ssub.s32 %s13, 1
        %s192 = sand.u32 %s68, 1
        %s193 = scalar_lea.sflag [#allocation4], %s192
        %s194 = sand.u32 %s68, 1
        %s195 = smul.addr %s194, 64
        %s196 = scalar_lea.vmem [#allocation3], %s195
        // Predicated region
        $region37: #{tpu_custom_call.1} parent=35 // pred_check
          %p197 = pneg %p81
        $region38: #{tpu_custom_call.1} parent=35 // pred_check_branch
          %199 = sbr.rel (%p197) target = $region40
        $region39: #{tpu_custom_call.1} parent=35 // pred_region
          %200 = dma.done %s193, 1024
        $region40: #{tpu_custom_call.1} parent=35 // pred_fallthru
          _
        %p201 = pneg %p34
        %p202 = pneg %p31
        %p203 = pneg %p55
        %p204 = pneg %p52
        %s205 = sand.u32 %s68, 1
        %s206 = scalar_lea.sflag [#allocation4], %s205
        %s207 = sand.u32 %s68, 1
        %s208 = smul.addr %s207, 64
        %s209 = scalar_lea.vmem [#allocation3], %s208
        %p210 = pneg %p81
        %p211 = pneg %p78
        %p212 = scmp.lt.s32.totalorder %s18, 2
        %s213 = scalar_select %p212, %s18, 2
        %s214 = scalar_lea.vmem %s3, %s213
        %p215 = pneg %p107
        %p216 = pneg %p104
        %p217 = pneg %p133
        %p218 = pneg %p130
        %p219 = scmp.lt.s32.totalorder %s18, 2
        %s220 = scalar_select %p219, %s18, 2
        %s221 = smul.addr %s220, 32
        %s222 = smul.addr %s221, 8
        %s223 = scalar_lea.vmem %s4, %s222
        %p224 = scmp.lt.s32.totalorder %s18, 2
        %s225 = scalar_select %p224, %s18, 2
        %s226 = scalar_lea.vmem %s3, %s225
        %p227 = scmp.lt.s32.totalorder %s18, 2
        %s228 = scalar_select %p227, %s18, 2
        %s229 = smul.addr %s228, 32
        %s230 = smul.addr %s229, 8
        %s231 = scalar_lea.vmem %s4, %s230
        %p233 = scmp.eq.s32.totalorder %s18, 0
        // Predicated region
        $region41: #{tpu_custom_call.1} parent=35 // pred_check
          %p234 = pneg %p233
        $region42: #{tpu_custom_call.1} parent=35 // pred_check_branch
          %236 = sbr.rel (%p234) target = $region44
        $region43: #{tpu_custom_call.1} parent=35 // pred_region
          %v237 = vld [vmem:[%s1] sm:$0xff]
          %v238 = vld [vmem:[%s1 + $0x8] sm:$0xff]
          %v239 = vld [vmem:[%s1 + $0x10] sm:$0xff]
          %v240 = vld [vmem:[%s1 + $0x18] sm:$0xff]
          %v241 = vld [vmem:[%s1 + $0x20] sm:$0xff]
          %v242 = vld [vmem:[%s1 + $0x28] sm:$0xff]
          %v243 = vld [vmem:[%s1 + $0x30] sm:$0xff]
          %v244 = vld [vmem:[%s1 + $0x38] sm:$0xff]
          %v245 = vld [vmem:[%s1 + $0x40] sm:$0xff]
          %v246 = vld [vmem:[%s1 + $0x48] sm:$0xff]
          %v247 = vld [vmem:[%s1 + $0x50] sm:$0xff]
          %v248 = vld [vmem:[%s1 + $0x58] sm:$0xff]
          %v249 = vld [vmem:[%s1 + $0x60] sm:$0xff]
          %v250 = vld [vmem:[%s1 + $0x68] sm:$0xff]
          %v251 = vld [vmem:[%s1 + $0x70] sm:$0xff]
          %v252 = vld [vmem:[%s1 + $0x78] sm:$0xff]
          %v253 = vld [vmem:[%s1 + $0x80] sm:$0xff]
          %v254 = vld [vmem:[%s1 + $0x88] sm:$0xff]
          %v255 = vld [vmem:[%s1 + $0x90] sm:$0xff]
          %v256 = vld [vmem:[%s1 + $0x98] sm:$0xff]
          %v257 = vld [vmem:[%s1 + $0xa0] sm:$0xff]
          %v258 = vld [vmem:[%s1 + $0xa8] sm:$0xff]
          %v259 = vld [vmem:[%s1 + $0xb0] sm:$0xff]
          %v260 = vld [vmem:[%s1 + $0xb8] sm:$0xff]
          %v261 = vld [vmem:[%s1 + $0xc0] sm:$0xff]
          %v262 = vld [vmem:[%s1 + $0xc8] sm:$0xff]
          %v263 = vld [vmem:[%s1 + $0xd0] sm:$0xff]
          %v264 = vld [vmem:[%s1 + $0xd8] sm:$0xff]
          %v265 = vld [vmem:[%s1 + $0xe0] sm:$0xff]
          %v266 = vld [vmem:[%s1 + $0xe8] sm:$0xff]
          %v267 = vld [vmem:[%s1 + $0xf0] sm:$0xff]
          %v268 = vld [vmem:[%s1 + $0xf8] sm:$0xff]
          %vm269 = vcmask 523264
          %270 = vst.msk [vmem:[#allocation2] sm:$0xff] %vm269, %v237
          %271 = vst.msk [vmem:[#allocation2 + $0x8] sm:$0xff] %vm269, %v238
          %272 = vst.msk [vmem:[#allocation2 + $0x10] sm:$0xff] %vm269, %v239
          %273 = vst.msk [vmem:[#allocation2 + $0x18] sm:$0xff] %vm269, %v240
          %274 = vst.msk [vmem:[#allocation2 + $0x20] sm:$0xff] %vm269, %v241
          %275 = vst.msk [vmem:[#allocation2 + $0x28] sm:$0xff] %vm269, %v242
          %276 = vst.msk [vmem:[#allocation2 + $0x30] sm:$0xff] %vm269, %v243
          %277 = vst.msk [vmem:[#allocation2 + $0x38] sm:$0xff] %vm269, %v244
          %278 = vst.msk [vmem:[#allocation2 + $0x40] sm:$0xff] %vm269, %v245
          %279 = vst.msk [vmem:[#allocation2 + $0x48] sm:$0xff] %vm269, %v246
          %280 = vst.msk [vmem:[#allocation2 + $0x50] sm:$0xff] %vm269, %v247
          %281 = vst.msk [vmem:[#allocation2 + $0x58] sm:$0xff] %vm269, %v248
          %282 = vst.msk [vmem:[#allocation2 + $0x60] sm:$0xff] %vm269, %v249
          %283 = vst.msk [vmem:[#allocation2 + $0x68] sm:$0xff] %vm269, %v250
          %284 = vst.msk [vmem:[#allocation2 + $0x70] sm:$0xff] %vm269, %v251
          %285 = vst.msk [vmem:[#allocation2 + $0x78] sm:$0xff] %vm269, %v252
          %286 = vst.msk [vmem:[#allocation2 + $0x80] sm:$0xff] %vm269, %v253
          %287 = vst.msk [vmem:[#allocation2 + $0x88] sm:$0xff] %vm269, %v254
          %288 = vst.msk [vmem:[#allocation2 + $0x90] sm:$0xff] %vm269, %v255
          %289 = vst.msk [vmem:[#allocation2 + $0x98] sm:$0xff] %vm269, %v256
          %290 = vst.msk [vmem:[#allocation2 + $0xa0] sm:$0xff] %vm269, %v257
          %291 = vst.msk [vmem:[#allocation2 + $0xa8] sm:$0xff] %vm269, %v258
          %292 = vst.msk [vmem:[#allocation2 + $0xb0] sm:$0xff] %vm269, %v259
          %293 = vst.msk [vmem:[#allocation2 + $0xb8] sm:$0xff] %vm269, %v260
          %294 = vst.msk [vmem:[#allocation2 + $0xc0] sm:$0xff] %vm269, %v261
          %295 = vst.msk [vmem:[#allocation2 + $0xc8] sm:$0xff] %vm269, %v262
          %296 = vst.msk [vmem:[#allocation2 + $0xd0] sm:$0xff] %vm269, %v263
          %297 = vst.msk [vmem:[#allocation2 + $0xd8] sm:$0xff] %vm269, %v264
          %298 = vst.msk [vmem:[#allocation2 + $0xe0] sm:$0xff] %vm269, %v265
          %299 = vst.msk [vmem:[#allocation2 + $0xe8] sm:$0xff] %vm269, %v266
          %300 = vst.msk [vmem:[#allocation2 + $0xf0] sm:$0xff] %vm269, %v267
          %301 = vst.msk [vmem:[#allocation2 + $0xf8] sm:$0xff] %vm269, %v268
        $region44: #{tpu_custom_call.1} parent=35 // pred_fallthru
          _
        %v302 = vld [vmem:[#allocation2] sm:$0xff]
        %v303 = vld [vmem:[#allocation2 + $0x8] sm:$0xff]
        %v304 = vld [vmem:[#allocation2 + $0x10] sm:$0xff]
        %v305 = vld [vmem:[#allocation2 + $0x18] sm:$0xff]
        %v306 = vld [vmem:[#allocation2 + $0x20] sm:$0xff]
        %v307 = vld [vmem:[#allocation2 + $0x28] sm:$0xff]
        %v308 = vld [vmem:[#allocation2 + $0x30] sm:$0xff]
        %v309 = vld [vmem:[#allocation2 + $0x38] sm:$0xff]
        %v310 = vld [vmem:[#allocation2 + $0x40] sm:$0xff]
        %v311 = vld [vmem:[#allocation2 + $0x48] sm:$0xff]
        %v312 = vld [vmem:[#allocation2 + $0x50] sm:$0xff]
        %v313 = vld [vmem:[#allocation2 + $0x58] sm:$0xff]
        %v314 = vld [vmem:[#allocation2 + $0x60] sm:$0xff]
        %v315 = vld [vmem:[#allocation2 + $0x68] sm:$0xff]
        %v316 = vld [vmem:[#allocation2 + $0x70] sm:$0xff]
        %v317 = vld [vmem:[#allocation2 + $0x78] sm:$0xff]
        %v318 = vld [vmem:[#allocation2 + $0x80] sm:$0xff]
        %v319 = vld [vmem:[#allocation2 + $0x88] sm:$0xff]
        %v320 = vld [vmem:[#allocation2 + $0x90] sm:$0xff]
        %v321 = vld [vmem:[#allocation2 + $0x98] sm:$0xff]
        %v322 = vld [vmem:[#allocation2 + $0xa0] sm:$0xff]
        %v323 = vld [vmem:[#allocation2 + $0xa8] sm:$0xff]
        %v324 = vld [vmem:[#allocation2 + $0xb0] sm:$0xff]
        %v325 = vld [vmem:[#allocation2 + $0xb8] sm:$0xff]
        %v326 = vld [vmem:[#allocation2 + $0xc0] sm:$0xff]
        %v327 = vld [vmem:[#allocation2 + $0xc8] sm:$0xff]
        %v328 = vld [vmem:[#allocation2 + $0xd0] sm:$0xff]
        %v329 = vld [vmem:[#allocation2 + $0xd8] sm:$0xff]
        %v330 = vld [vmem:[#allocation2 + $0xe0] sm:$0xff]
        %v331 = vld [vmem:[#allocation2 + $0xe8] sm:$0xff]
        %v332 = vld [vmem:[#allocation2 + $0xf0] sm:$0xff]
        %v333 = vld [vmem:[#allocation2 + $0xf8] sm:$0xff]
        %v334 = vmul.f32 %v302, %v302
        %v335 = vmul.f32 %v303, %v303
        %v336 = vmul.f32 %v304, %v304
        %v337 = vmul.f32 %v305, %v305
        %v338 = vmul.f32 %v306, %v306
        %v339 = vmul.f32 %v307, %v307
        %v340 = vmul.f32 %v308, %v308
        %v341 = vmul.f32 %v309, %v309
        %v342 = vmul.f32 %v310, %v310
        %v343 = vmul.f32 %v311, %v311
        %v344 = vmul.f32 %v312, %v312
        %v345 = vmul.f32 %v313, %v313
        %v346 = vmul.f32 %v314, %v314
        %v347 = vmul.f32 %v315, %v315
        %v348 = vmul.f32 %v316, %v316
        %v349 = vmul.f32 %v317, %v317
        %v350 = vmul.f32 %v318, %v318
        %v351 = vmul.f32 %v319, %v319
        %v352 = vmul.f32 %v320, %v320
        %v353 = vmul.f32 %v321, %v321
        %v354 = vmul.f32 %v322, %v322
        %v355 = vmul.f32 %v323, %v323
        %v356 = vmul.f32 %v324, %v324
        %v357 = vmul.f32 %v325, %v325
        %v358 = vmul.f32 %v326, %v326
        %v359 = vmul.f32 %v327, %v327
        %v360 = vmul.f32 %v328, %v328
        %v361 = vmul.f32 %v329, %v329
        %v362 = vmul.f32 %v330, %v330
        %v363 = vmul.f32 %v331, %v331
        %v364 = vmul.f32 %v332, %v332
        %v365 = vmul.f32 %v333, %v333
        %v366 = vadd.f32 %v302, %v334
        %v367 = vadd.f32 %v303, %v335
        %v368 = vadd.f32 %v304, %v336
        %v369 = vadd.f32 %v305, %v337
        %v370 = vadd.f32 %v306, %v338
        %v371 = vadd.f32 %v307, %v339
        %v372 = vadd.f32 %v308, %v340
        %v373 = vadd.f32 %v309, %v341
        %v374 = vadd.f32 %v310, %v342
        %v375 = vadd.f32 %v311, %v343
        %v376 = vadd.f32 %v312, %v344
        %v377 = vadd.f32 %v313, %v345
        %v378 = vadd.f32 %v314, %v346
        %v379 = vadd.f32 %v315, %v347
        %v380 = vadd.f32 %v316, %v348
        %v381 = vadd.f32 %v317, %v349
        %v382 = vadd.f32 %v318, %v350
        %v383 = vadd.f32 %v319, %v351
        %v384 = vadd.f32 %v320, %v352
        %v385 = vadd.f32 %v321, %v353
        %v386 = vadd.f32 %v322, %v354
        %v387 = vadd.f32 %v323, %v355
        %v388 = vadd.f32 %v324, %v356
        %v389 = vadd.f32 %v325, %v357
        %v390 = vadd.f32 %v326, %v358
        %v391 = vadd.f32 %v327, %v359
        %v392 = vadd.f32 %v328, %v360
        %v393 = vadd.f32 %v329, %v361
        %v394 = vadd.f32 %v330, %v362
        %v395 = vadd.f32 %v331, %v363
        %v396 = vadd.f32 %v332, %v364
        %v397 = vadd.f32 %v333, %v365
        %v398 = vpack.c.bf16 %v367, %v366
        %v399 = vpack.c.bf16 %v369, %v368
        %v400 = vpack.c.bf16 %v371, %v370
        %v401 = vpack.c.bf16 %v373, %v372
        %v402 = vpack.c.bf16 %v375, %v374
        %v403 = vpack.c.bf16 %v377, %v376
        %v404 = vpack.c.bf16 %v379, %v378
        %v405 = vpack.c.bf16 %v381, %v380
        %v406 = vpack.c.bf16 %v383, %v382
        %v407 = vpack.c.bf16 %v385, %v384
        %v408 = vpack.c.bf16 %v387, %v386
        %v409 = vpack.c.bf16 %v389, %v388
        %v410 = vpack.c.bf16 %v391, %v390
        %v411 = vpack.c.bf16 %v393, %v392
        %v412 = vpack.c.bf16 %v395, %v394
        %v413 = vpack.c.bf16 %v397, %v396
        %v414 = vld [vmem:[%s0] sm:$0xff]
        %v415 = vld [vmem:[%s0 + $0x8] sm:$0xff]
        %v416 = vld [vmem:[%s0 + $0x10] sm:$0xff]
        %v417 = vld [vmem:[%s0 + $0x18] sm:$0xff]
        %v418 = vld [vmem:[%s0 + $0x20] sm:$0xff]
        %v419 = vld [vmem:[%s0 + $0x28] sm:$0xff]
        %v420 = vld [vmem:[%s0 + $0x30] sm:$0xff]
        %v421 = vld [vmem:[%s0 + $0x38] sm:$0xff]
        %v422 = vld [vmem:[%s0 + $0x40] sm:$0xff]
        %v423 = vld [vmem:[%s0 + $0x48] sm:$0xff]
        %v424 = vld [vmem:[%s0 + $0x50] sm:$0xff]
        %v425 = vld [vmem:[%s0 + $0x58] sm:$0xff]
        %v426 = vld [vmem:[%s0 + $0x60] sm:$0xff]
        %v427 = vld [vmem:[%s0 + $0x68] sm:$0xff]
        %v428 = vld [vmem:[%s0 + $0x70] sm:$0xff]
        %v429 = vld [vmem:[%s0 + $0x78] sm:$0xff]
        %v430 = vld [vmem:[%s0 + $0x80] sm:$0xff]
        %v431 = vld [vmem:[%s0 + $0x88] sm:$0xff]
        %v432 = vld [vmem:[%s0 + $0x90] sm:$0xff]
        %v433 = vld [vmem:[%s0 + $0x98] sm:$0xff]
        %v434 = vld [vmem:[%s0 + $0xa0] sm:$0xff]
        %v435 = vld [vmem:[%s0 + $0xa8] sm:$0xff]
        %v436 = vld [vmem:[%s0 + $0xb0] sm:$0xff]
        %v437 = vld [vmem:[%s0 + $0xb8] sm:$0xff]
        %v438 = vld [vmem:[%s0 + $0xc0] sm:$0xff]
        %v439 = vld [vmem:[%s0 + $0xc8] sm:$0xff]
        %v440 = vld [vmem:[%s0 + $0xd0] sm:$0xff]
        %v441 = vld [vmem:[%s0 + $0xd8] sm:$0xff]
        %v442 = vld [vmem:[%s0 + $0xe0] sm:$0xff]
        %v443 = vld [vmem:[%s0 + $0xe8] sm:$0xff]
        %v444 = vld [vmem:[%s0 + $0xf0] sm:$0xff]
        %v445 = vld [vmem:[%s0 + $0xf8] sm:$0xff]
        %v478 = vunpack.c.l.b16 %v414
        %v479 = vunpack.c.h.b16 %v414
        %v480 = vunpack.c.l.b16 %v415
        %v481 = vunpack.c.h.b16 %v415
        %v482 = vunpack.c.l.b16 %v416
        %v483 = vunpack.c.h.b16 %v416
        %v484 = vunpack.c.l.b16 %v417
        %v485 = vunpack.c.h.b16 %v417
        %v486 = vunpack.c.l.b16 %v418
        %v487 = vunpack.c.h.b16 %v418
        %v488 = vunpack.c.l.b16 %v419
        %v489 = vunpack.c.h.b16 %v419
        %v490 = vunpack.c.l.b16 %v420
        %v491 = vunpack.c.h.b16 %v420
        %v492 = vunpack.c.l.b16 %v421
        %v493 = vunpack.c.h.b16 %v421
        %v494 = vunpack.c.l.b16 %v422
        %v495 = vunpack.c.h.b16 %v422
        %v496 = vunpack.c.l.b16 %v423
        %v497 = vunpack.c.h.b16 %v423
        %v498 = vunpack.c.l.b16 %v424
        %v499 = vunpack.c.h.b16 %v424
        %v500 = vunpack.c.l.b16 %v425
        %v501 = vunpack.c.h.b16 %v425
        %v502 = vunpack.c.l.b16 %v426
        %v503 = vunpack.c.h.b16 %v426
        %v504 = vunpack.c.l.b16 %v427
        %v505 = vunpack.c.h.b16 %v427
        %v506 = vunpack.c.l.b16 %v428
        %v507 = vunpack.c.h.b16 %v428
        %v508 = vunpack.c.l.b16 %v429
        %v509 = vunpack.c.h.b16 %v429
        %v510 = vunpack.c.l.b16 %v430
        %v511 = vunpack.c.h.b16 %v430
        %v512 = vunpack.c.l.b16 %v431
        %v513 = vunpack.c.h.b16 %v431
        %v514 = vunpack.c.l.b16 %v432
        %v515 = vunpack.c.h.b16 %v432
        %v516 = vunpack.c.l.b16 %v433
        %v517 = vunpack.c.h.b16 %v433
        %v518 = vunpack.c.l.b16 %v434
        %v519 = vunpack.c.h.b16 %v434
        %v520 = vunpack.c.l.b16 %v435
        %v521 = vunpack.c.h.b16 %v435
        %v522 = vunpack.c.l.b16 %v436
        %v523 = vunpack.c.h.b16 %v436
        %v524 = vunpack.c.l.b16 %v437
        %v525 = vunpack.c.h.b16 %v437
        %v526 = vunpack.c.l.b16 %v438
        %v527 = vunpack.c.h.b16 %v438
        %v528 = vunpack.c.l.b16 %v439
        %v529 = vunpack.c.h.b16 %v439
        %v530 = vunpack.c.l.b16 %v440
        %v531 = vunpack.c.h.b16 %v440
        %v532 = vunpack.c.l.b16 %v441
        %v533 = vunpack.c.h.b16 %v441
        %v534 = vunpack.c.l.b16 %v442
        %v535 = vunpack.c.h.b16 %v442
        %v536 = vunpack.c.l.b16 %v443
        %v537 = vunpack.c.h.b16 %v443
        %v538 = vunpack.c.l.b16 %v444
        %v539 = vunpack.c.h.b16 %v444
        %v540 = vunpack.c.l.b16 %v445
        %v541 = vunpack.c.h.b16 %v445
        %v542 = vpack.c.b16 %v480, %v478
        %v543 = vpack.c.b16 %v481, %v479
        %v544 = vpack.c.b16 %v484, %v482
        %v545 = vpack.c.b16 %v485, %v483
        %v546 = vpack.c.b16 %v488, %v486
        %v547 = vpack.c.b16 %v489, %v487
        %v548 = vpack.c.b16 %v492, %v490
        %v549 = vpack.c.b16 %v493, %v491
        %v550 = vpack.c.b16 %v496, %v494
        %v551 = vpack.c.b16 %v497, %v495
        %v552 = vpack.c.b16 %v500, %v498
        %v553 = vpack.c.b16 %v501, %v499
        %v554 = vpack.c.b16 %v504, %v502
        %v555 = vpack.c.b16 %v505, %v503
        %v556 = vpack.c.b16 %v508, %v506
        %v557 = vpack.c.b16 %v509, %v507
        %v558 = vpack.c.b16 %v512, %v510
        %v559 = vpack.c.b16 %v513, %v511
        %v560 = vpack.c.b16 %v516, %v514
        %v561 = vpack.c.b16 %v517, %v515
        %v562 = vpack.c.b16 %v520, %v518
        %v563 = vpack.c.b16 %v521, %v519
        %v564 = vpack.c.b16 %v524, %v522
        %v565 = vpack.c.b16 %v525, %v523
        %v566 = vpack.c.b16 %v528, %v526
        %v567 = vpack.c.b16 %v529, %v527
        %v568 = vpack.c.b16 %v532, %v530
        %v569 = vpack.c.b16 %v533, %v531
        %v570 = vpack.c.b16 %v536, %v534
        %v571 = vpack.c.b16 %v537, %v535
        %v572 = vpack.c.b16 %v540, %v538
        %v573 = vpack.c.b16 %v541, %v539
        %606 = vmatprep.subr.bf16.mxu0 0
        %607 = vmatpush1.bf16.msra.mxu0 %v405
        %608 = vmatprep.subr.bf16.mxu0 0
        %609 = vmatpush1.bf16.msra.mxu0 %v404
        %610 = vmatprep.subr.bf16.mxu0 0
        %611 = vmatpush1.bf16.msra.mxu0 %v403
        %612 = vmatprep.subr.bf16.mxu0 0
        %613 = vmatpush1.bf16.msra.mxu0 %v402
        %614 = vmatprep.subr.bf16.mxu0 0
        %615 = vmatpush1.bf16.msra.mxu0 %v401
        %616 = vmatprep.subr.bf16.mxu0 0
        %617 = vmatpush1.bf16.msra.mxu0 %v400
        %618 = vmatprep.subr.bf16.mxu0 0
        %619 = vmatpush1.bf16.msra.mxu0 %v399
        %620 = vmatprep.subr.bf16.mxu0 0
        %621 = vmatpush1.bf16.msra.mxu0 %v398
        %622 = vmatprep.subr.bf16.mxu0 0
        %623 = vmatpush2.bf16.msra.mxu0 %v413
        %624 = vmatprep.subr.bf16.mxu0 0
        %625 = vmatpush2.bf16.msra.mxu0 %v412
        %626 = vmatprep.subr.bf16.mxu0 0
        %627 = vmatpush2.bf16.msra.mxu0 %v411
        %628 = vmatprep.subr.bf16.mxu0 0
        %629 = vmatpush2.bf16.msra.mxu0 %v410
        %630 = vmatprep.subr.bf16.mxu0 0
        %631 = vmatpush2.bf16.msra.mxu0 %v409
        %632 = vmatprep.subr.bf16.mxu0 0
        %633 = vmatpush2.bf16.msra.mxu0 %v408
        %634 = vmatprep.subr.bf16.mxu0 0
        %635 = vmatpush2.bf16.msra.mxu0 %v407
        %636 = vmatprep.subr.bf16.mxu0 0
        %637 = vmatpush2.bf16.msra.mxu0 %v406
        %638 = vmatprep.mubr.bf16.mxu0 %v543
        %639 = vmatmul.mubr.bf16.gmra.mxu0 %v542
        %v640 = vpop.f32.mrf.mxu0
        %v641 = vadd.f32 %v302, %v640
        %v642 = vpop.f32.mrf.mxu0
        %v643 = vpop.f32.mrf.mxu0
        %v644 = vadd.f32 %v303, %v643
        %v645 = vpop.f32.mrf.mxu0
        %646 = vmatprep.mubr.bf16.mxu0 %v545
        %647 = vmatmul.mubr.bf16.gmra.mxu0 %v544
        %v648 = vpop.f32.mrf.mxu0
        %v649 = vadd.f32 %v304, %v648
        %v650 = vpop.f32.mrf.mxu0
        %v651 = vpop.f32.mrf.mxu0
        %v652 = vadd.f32 %v305, %v651
        %v653 = vpop.f32.mrf.mxu0
        %654 = vmatprep.mubr.bf16.mxu0 %v547
        %655 = vmatmul.mubr.bf16.gmra.mxu0 %v546
        %v656 = vpop.f32.mrf.mxu0
        %v657 = vadd.f32 %v306, %v656
        %v658 = vpop.f32.mrf.mxu0
        %v659 = vpop.f32.mrf.mxu0
        %v660 = vadd.f32 %v307, %v659
        %v661 = vpop.f32.mrf.mxu0
        %662 = vmatprep.mubr.bf16.mxu0 %v549
        %663 = vmatmul.mubr.bf16.gmra.mxu0 %v548
        %v664 = vpop.f32.mrf.mxu0
        %v665 = vadd.f32 %v308, %v664
        %v666 = vpop.f32.mrf.mxu0
        %v667 = vpop.f32.mrf.mxu0
        %v668 = vadd.f32 %v309, %v667
        %v669 = vpop.f32.mrf.mxu0
        %670 = vmatprep.mubr.bf16.mxu0 %v551
        %671 = vmatmul.mubr.bf16.gmra.mxu0 %v550
        %v672 = vpop.f32.mrf.mxu0
        %v673 = vadd.f32 %v310, %v672
        %v674 = vpop.f32.mrf.mxu0
        %v675 = vpop.f32.mrf.mxu0
        %v676 = vadd.f32 %v311, %v675
        %v677 = vpop.f32.mrf.mxu0
        %678 = vmatprep.mubr.bf16.mxu0 %v553
        %679 = vmatmul.mubr.bf16.gmra.mxu0 %v552
        %v680 = vpop.f32.mrf.mxu0
        %v681 = vadd.f32 %v312, %v680
        %v682 = vpop.f32.mrf.mxu0
        %v683 = vpop.f32.mrf.mxu0
        %v684 = vadd.f32 %v313, %v683
        %v685 = vpop.f32.mrf.mxu0
        %686 = vmatprep.mubr.bf16.mxu0 %v555
        %687 = vmatmul.mubr.bf16.gmra.mxu0 %v554
        %v688 = vpop.f32.mrf.mxu0
        %v689 = vadd.f32 %v314, %v688
        %v690 = vpop.f32.mrf.mxu0
        %v691 = vpop.f32.mrf.mxu0
        %v692 = vadd.f32 %v315, %v691
        %v693 = vpop.f32.mrf.mxu0
        %694 = vmatprep.mubr.bf16.mxu0 %v557
        %695 = vmatmul.mubr.bf16.gmra.mxu0 %v556
        %v696 = vpop.f32.mrf.mxu0
        %v697 = vadd.f32 %v316, %v696
        %v698 = vpop.f32.mrf.mxu0
        %v699 = vpop.f32.mrf.mxu0
        %v700 = vadd.f32 %v317, %v699
        %v701 = vpop.f32.mrf.mxu0
        %702 = vmatprep.mubr.bf16.mxu0 %v559
        %703 = vmatmul.mubr.bf16.gmra.mxu0 %v558
        %v704 = vpop.f32.mrf.mxu0
        %v705 = vadd.f32 %v318, %v704
        %v706 = vpop.f32.mrf.mxu0
        %v707 = vpop.f32.mrf.mxu0
        %v708 = vadd.f32 %v319, %v707
        %v709 = vpop.f32.mrf.mxu0
        %710 = vmatprep.mubr.bf16.mxu0 %v561
        %711 = vmatmul.mubr.bf16.gmra.mxu0 %v560
        %v712 = vpop.f32.mrf.mxu0
        %v713 = vadd.f32 %v320, %v712
        %v714 = vpop.f32.mrf.mxu0
        %v715 = vpop.f32.mrf.mxu0
        %v716 = vadd.f32 %v321, %v715
        %v717 = vpop.f32.mrf.mxu0
        %718 = vmatprep.mubr.bf16.mxu0 %v563
        %719 = vmatmul.mubr.bf16.gmra.mxu0 %v562
        %v720 = vpop.f32.mrf.mxu0
        %v721 = vadd.f32 %v322, %v720
        %v722 = vpop.f32.mrf.mxu0
        %v723 = vpop.f32.mrf.mxu0
        %v724 = vadd.f32 %v323, %v723
        %v725 = vpop.f32.mrf.mxu0
        %726 = vmatprep.mubr.bf16.mxu0 %v565
        %727 = vmatmul.mubr.bf16.gmra.mxu0 %v564
        %v728 = vpop.f32.mrf.mxu0
        %v729 = vadd.f32 %v324, %v728
        %v730 = vpop.f32.mrf.mxu0
        %v731 = vpop.f32.mrf.mxu0
        %v732 = vadd.f32 %v325, %v731
        %v733 = vpop.f32.mrf.mxu0
        %734 = vmatprep.mubr.bf16.mxu0 %v567
        %735 = vmatmul.mubr.bf16.gmra.mxu0 %v566
        %v736 = vpop.f32.mrf.mxu0
        %v737 = vadd.f32 %v326, %v736
        %v738 = vpop.f32.mrf.mxu0
        %v739 = vpop.f32.mrf.mxu0
        %v740 = vadd.f32 %v327, %v739
        %v741 = vpop.f32.mrf.mxu0
        %742 = vmatprep.mubr.bf16.mxu0 %v569
        %743 = vmatmul.mubr.bf16.gmra.mxu0 %v568
        %v744 = vpop.f32.mrf.mxu0
        %v745 = vadd.f32 %v328, %v744
        %v746 = vpop.f32.mrf.mxu0
        %v747 = vpop.f32.mrf.mxu0
        %v748 = vadd.f32 %v329, %v747
        %v749 = vpop.f32.mrf.mxu0
        %750 = vmatprep.mubr.bf16.mxu0 %v571
        %751 = vmatmul.mubr.bf16.gmra.mxu0 %v570
        %v752 = vpop.f32.mrf.mxu0
        %v753 = vadd.f32 %v330, %v752
        %v754 = vpop.f32.mrf.mxu0
        %v755 = vpop.f32.mrf.mxu0
        %v756 = vadd.f32 %v331, %v755
        %v757 = vpop.f32.mrf.mxu0
        %758 = vmatprep.mubr.bf16.mxu0 %v573
        %759 = vmatmul.mubr.bf16.gmra.mxu0 %v572
        %v760 = vpop.f32.mrf.mxu0
        %v761 = vadd.f32 %v332, %v760
        %v762 = vpop.f32.mrf.mxu0
        %v763 = vpop.f32.mrf.mxu0
        %v764 = vadd.f32 %v333, %v763
        %v765 = vpop.f32.mrf.mxu0
        %766 = vdwg.mxu0
        %v767 = vld [vmem:[%s196] sm:$0xff]
        %v768 = vld [vmem:[%s196 + $0x8] sm:$0xff]
        %v769 = vld [vmem:[%s196 + $0x10] sm:$0xff]
        %v770 = vld [vmem:[%s196 + $0x18] sm:$0xff]
        %v771 = vld [vmem:[%s196 + $0x20] sm:$0xff]
        %v772 = vld [vmem:[%s196 + $0x28] sm:$0xff]
        %v773 = vld [vmem:[%s196 + $0x30] sm:$0xff]
        %v774 = vld [vmem:[%s196 + $0x38] sm:$0xff]
        %v775 = vld [vmem:[%s226] sm:$0x1]
        %v777 = vlaneseq
        %v778 = vshrl.u32 %v777, 7
        %v779 = vsub.s32 0, %v778
        %v780 = vrot.slane %v775, %v779
        %vm782 = vcmask 523264
        %v784 = vsel %vm782, %v641, 0
        %v787 = vsel %vm782, %v644, 0
        %v790 = vsel %vm782, %v649, 0
        %v793 = vsel %vm782, %v652, 0
        %v796 = vsel %vm782, %v657, 0
        %v799 = vsel %vm782, %v660, 0
        %v802 = vsel %vm782, %v665, 0
        %v805 = vsel %vm782, %v668, 0
        %v808 = vsel %vm782, %v673, 0
        %v811 = vsel %vm782, %v676, 0
        %v814 = vsel %vm782, %v681, 0
        %v817 = vsel %vm782, %v684, 0
        %v820 = vsel %vm782, %v689, 0
        %v823 = vsel %vm782, %v692, 0
        %v826 = vsel %vm782, %v697, 0
        %v829 = vsel %vm782, %v700, 0
        %v832 = vsel %vm782, %v705, 0
        %v835 = vsel %vm782, %v708, 0
        %v838 = vsel %vm782, %v713, 0
        %v841 = vsel %vm782, %v716, 0
        %v844 = vsel %vm782, %v721, 0
        %v847 = vsel %vm782, %v724, 0
        %v850 = vsel %vm782, %v729, 0
        %v853 = vsel %vm782, %v732, 0
        %v856 = vsel %vm782, %v737, 0
        %v859 = vsel %vm782, %v740, 0
        %v862 = vsel %vm782, %v745, 0
        %v865 = vsel %vm782, %v748, 0
        %v868 = vsel %vm782, %v753, 0
        %v871 = vsel %vm782, %v756, 0
        %v874 = vsel %vm782, %v761, 0
        %v877 = vsel %vm782, %v764, 0
        %879 = vmatprep.subr.mxu0 0.0
        %880 = vmatpush1.msra.mxu0 0.0
        %881 = vmatprep.subr.mxu0 0.0
        %882 = vmatpush1.msra.mxu0 0.0
        %883 = vmatprep.subr.mxu0 0.0
        %884 = vmatpush1.msra.mxu0 0.0
        %885 = vmatprep.subr.mxu0 0.0
        %886 = vmatpush1.msra.mxu0 0.0
        %887 = vmatprep.subr.mxu0 0.0
        %888 = vmatpush1.msra.mxu0 0.0
        %889 = vmatprep.subr.mxu0 0.0
        %890 = vmatpush1.msra.mxu0 0.0
        %891 = vmatprep.subr.mxu0 0.0
        %892 = vmatpush1.msra.mxu0 0.0
        %893 = vmatprep.subr.mxu0 0.0
        %894 = vmatpush1.msra.mxu0 0.0
        %895 = vmatprep.subr.mxu0 0.0
        %896 = vmatpush1.msra.mxu0 %v774
        %897 = vmatprep.subr.mxu0 0.0
        %898 = vmatpush1.msra.mxu0 %v773
        %899 = vmatprep.subr.mxu0 0.0
        %900 = vmatpush1.msra.mxu0 %v772
        %901 = vmatprep.subr.mxu0 0.0
        %902 = vmatpush1.msra.mxu0 %v771
        %903 = vmatprep.subr.mxu0 0.0
        %904 = vmatpush1.msra.mxu0 %v770
        %905 = vmatprep.subr.mxu0 0.0
        %906 = vmatpush1.msra.mxu0 %v769
        %907 = vmatprep.subr.mxu0 0.0
        %908 = vmatpush1.msra.mxu0 %v768
        %909 = vmatprep.subr.mxu0 0.0
        %910 = vmatpush1.msra.mxu0 %v767
        %911 = vmatprep.subr.mxu0 0.0
        %912 = vmatpush2.msra.mxu0 0.0
        %913 = vmatprep.subr.mxu0 0.0
        %914 = vmatpush2.msra.mxu0 0.0
        %915 = vmatprep.subr.mxu0 0.0
        %916 = vmatpush2.msra.mxu0 0.0
        %917 = vmatprep.subr.mxu0 0.0
        %918 = vmatpush2.msra.mxu0 0.0
        %919 = vmatprep.subr.mxu0 0.0
        %920 = vmatpush2.msra.mxu0 0.0
        %921 = vmatprep.subr.mxu0 0.0
        %922 = vmatpush2.msra.mxu0 0.0
        %923 = vmatprep.subr.mxu0 0.0
        %924 = vmatpush2.msra.mxu0 0.0
        %925 = vmatprep.subr.mxu0 0.0
        %926 = vmatpush2.msra.mxu0 0.0
        %927 = vmatprep.subr.mxu0 0.0
        %928 = vmatpush2.msra.mxu0 0.0
        %929 = vmatprep.subr.mxu0 0.0
        %930 = vmatpush2.msra.mxu0 0.0
        %931 = vmatprep.subr.mxu0 0.0
        %932 = vmatpush2.msra.mxu0 0.0
        %933 = vmatprep.subr.mxu0 0.0
        %934 = vmatpush2.msra.mxu0 0.0
        %935 = vmatprep.subr.mxu0 0.0
        %936 = vmatpush2.msra.mxu0 0.0
        %937 = vmatprep.subr.mxu0 0.0
        %938 = vmatpush2.msra.mxu0 0.0
        %939 = vmatprep.subr.mxu0 0.0
        %940 = vmatpush2.msra.mxu0 0.0
        %941 = vmatprep.subr.mxu0 0.0
        %942 = vmatpush2.msra.mxu0 0.0
        %943 = vmatprep.mubr.f32.mxu0 0.0
        %944 = vmatmul.mubr.f32.gmra.mxu0 %v784
        %v945 = vpop.f32.mrf.mxu0
        %v946 = vadd.f32 %v780, %v945
        %v947 = vpop.f32.mrf.mxu0
        %948 = vmatprep.mubr.f32.mxu0 0.0
        %949 = vmatmul.mubr.f32.gmra.mxu0 %v787
        %v950 = vpop.f32.mrf.mxu0
        %v951 = vadd.f32 %v780, %v950
        %v952 = vpop.f32.mrf.mxu0
        %953 = vmatprep.mubr.f32.mxu0 0.0
        %954 = vmatmul.mubr.f32.gmra.mxu0 %v790
        %v955 = vpop.f32.mrf.mxu0
        %v956 = vadd.f32 %v780, %v955
        %v957 = vpop.f32.mrf.mxu0
        %958 = vmatprep.mubr.f32.mxu0 0.0
        %959 = vmatmul.mubr.f32.gmra.mxu0 %v793
        %v960 = vpop.f32.mrf.mxu0
        %v961 = vadd.f32 %v780, %v960
        %v962 = vpop.f32.mrf.mxu0
        %963 = vmatprep.mubr.f32.mxu0 0.0
        %964 = vmatmul.mubr.f32.gmra.mxu0 %v796
        %v965 = vpop.f32.mrf.mxu0
        %v966 = vadd.f32 %v780, %v965
        %v967 = vpop.f32.mrf.mxu0
        %968 = vmatprep.mubr.f32.mxu0 0.0
        %969 = vmatmul.mubr.f32.gmra.mxu0 %v799
        %v970 = vpop.f32.mrf.mxu0
        %v971 = vadd.f32 %v780, %v970
        %v972 = vpop.f32.mrf.mxu0
        %973 = vmatprep.mubr.f32.mxu0 0.0
        %974 = vmatmul.mubr.f32.gmra.mxu0 %v802
        %v975 = vpop.f32.mrf.mxu0
        %v976 = vadd.f32 %v780, %v975
        %v977 = vpop.f32.mrf.mxu0
        %978 = vmatprep.mubr.f32.mxu0 0.0
        %979 = vmatmul.mubr.f32.gmra.mxu0 %v805
        %v980 = vpop.f32.mrf.mxu0
        %v981 = vadd.f32 %v780, %v980
        %v982 = vpop.f32.mrf.mxu0
        %983 = vmatprep.mubr.f32.mxu0 0.0
        %984 = vmatmul.mubr.f32.gmra.mxu0 %v808
        %v985 = vpop.f32.mrf.mxu0
        %v986 = vadd.f32 %v780, %v985
        %v987 = vpop.f32.mrf.mxu0
        %988 = vmatprep.mubr.f32.mxu0 0.0
        %989 = vmatmul.mubr.f32.gmra.mxu0 %v811
        %v990 = vpop.f32.mrf.mxu0
        %v991 = vadd.f32 %v780, %v990
        %v992 = vpop.f32.mrf.mxu0
        %993 = vmatprep.mubr.f32.mxu0 0.0
        %994 = vmatmul.mubr.f32.gmra.mxu0 %v814
        %v995 = vpop.f32.mrf.mxu0
        %v996 = vadd.f32 %v780, %v995
        %v997 = vpop.f32.mrf.mxu0
        %998 = vmatprep.mubr.f32.mxu0 0.0
        %999 = vmatmul.mubr.f32.gmra.mxu0 %v817
        %v1000 = vpop.f32.mrf.mxu0
        %v1001 = vadd.f32 %v780, %v1000
        %v1002 = vpop.f32.mrf.mxu0
        %1003 = vmatprep.mubr.f32.mxu0 0.0
        %1004 = vmatmul.mubr.f32.gmra.mxu0 %v820
        %v1005 = vpop.f32.mrf.mxu0
        %v1006 = vadd.f32 %v780, %v1005
        %v1007 = vpop.f32.mrf.mxu0
        %1008 = vmatprep.mubr.f32.mxu0 0.0
        %1009 = vmatmul.mubr.f32.gmra.mxu0 %v823
        %v1010 = vpop.f32.mrf.mxu0
        %v1011 = vadd.f32 %v780, %v1010
        %v1012 = vpop.f32.mrf.mxu0
        %1013 = vmatprep.mubr.f32.mxu0 0.0
        %1014 = vmatmul.mubr.f32.gmra.mxu0 %v826
        %v1015 = vpop.f32.mrf.mxu0
        %v1016 = vadd.f32 %v780, %v1015
        %v1017 = vpop.f32.mrf.mxu0
        %1018 = vmatprep.mubr.f32.mxu0 0.0
        %1019 = vmatmul.mubr.f32.gmra.mxu0 %v829
        %v1020 = vpop.f32.mrf.mxu0
        %v1021 = vadd.f32 %v780, %v1020
        %v1022 = vpop.f32.mrf.mxu0
        %1023 = vmatprep.mubr.f32.mxu0 0.0
        %1024 = vmatmul.mubr.f32.gmra.mxu0 %v832
        %v1025 = vpop.f32.mrf.mxu0
        %v1026 = vadd.f32 %v780, %v1025
        %v1027 = vpop.f32.mrf.mxu0
        %1028 = vmatprep.mubr.f32.mxu0 0.0
        %1029 = vmatmul.mubr.f32.gmra.mxu0 %v835
        %v1030 = vpop.f32.mrf.mxu0
        %v1031 = vadd.f32 %v780, %v1030
        %v1032 = vpop.f32.mrf.mxu0
        %1033 = vmatprep.mubr.f32.mxu0 0.0
        %1034 = vmatmul.mubr.f32.gmra.mxu0 %v838
        %v1035 = vpop.f32.mrf.mxu0
        %v1036 = vadd.f32 %v780, %v1035
        %v1037 = vpop.f32.mrf.mxu0
        %1038 = vmatprep.mubr.f32.mxu0 0.0
        %1039 = vmatmul.mubr.f32.gmra.mxu0 %v841
        %v1040 = vpop.f32.mrf.mxu0
        %v1041 = vadd.f32 %v780, %v1040
        %v1042 = vpop.f32.mrf.mxu0
        %1043 = vmatprep.mubr.f32.mxu0 0.0
        %1044 = vmatmul.mubr.f32.gmra.mxu0 %v844
        %v1045 = vpop.f32.mrf.mxu0
        %v1046 = vadd.f32 %v780, %v1045
        %v1047 = vpop.f32.mrf.mxu0
        %1048 = vmatprep.mubr.f32.mxu0 0.0
        %1049 = vmatmul.mubr.f32.gmra.mxu0 %v847
        %v1050 = vpop.f32.mrf.mxu0
        %v1051 = vadd.f32 %v780, %v1050
        %v1052 = vpop.f32.mrf.mxu0
        %1053 = vmatprep.mubr.f32.mxu0 0.0
        %1054 = vmatmul.mubr.f32.gmra.mxu0 %v850
        %v1055 = vpop.f32.mrf.mxu0
        %v1056 = vadd.f32 %v780, %v1055
        %v1057 = vpop.f32.mrf.mxu0
        %1058 = vmatprep.mubr.f32.mxu0 0.0
        %1059 = vmatmul.mubr.f32.gmra.mxu0 %v853
        %v1060 = vpop.f32.mrf.mxu0
        %v1061 = vadd.f32 %v780, %v1060
        %v1062 = vpop.f32.mrf.mxu0
        %1063 = vmatprep.mubr.f32.mxu0 0.0
        %1064 = vmatmul.mubr.f32.gmra.mxu0 %v856
        %v1065 = vpop.f32.mrf.mxu0
        %v1066 = vadd.f32 %v780, %v1065
        %v1067 = vpop.f32.mrf.mxu0
        %1068 = vmatprep.mubr.f32.mxu0 0.0
        %1069 = vmatmul.mubr.f32.gmra.mxu0 %v859
        %v1070 = vpop.f32.mrf.mxu0
        %v1071 = vadd.f32 %v780, %v1070
        %v1072 = vpop.f32.mrf.mxu0
        %1073 = vmatprep.mubr.f32.mxu0 0.0
        %1074 = vmatmul.mubr.f32.gmra.mxu0 %v862
        %v1075 = vpop.f32.mrf.mxu0
        %v1076 = vadd.f32 %v780, %v1075
        %v1077 = vpop.f32.mrf.mxu0
        %1078 = vmatprep.mubr.f32.mxu0 0.0
        %1079 = vmatmul.mubr.f32.gmra.mxu0 %v865
        %v1080 = vpop.f32.mrf.mxu0
        %v1081 = vadd.f32 %v780, %v1080
        %v1082 = vpop.f32.mrf.mxu0
        %1083 = vmatprep.mubr.f32.mxu0 0.0
        %1084 = vmatmul.mubr.f32.gmra.mxu0 %v868
        %v1085 = vpop.f32.mrf.mxu0
        %v1086 = vadd.f32 %v780, %v1085
        %v1087 = vpop.f32.mrf.mxu0
        %1088 = vmatprep.mubr.f32.mxu0 0.0
        %1089 = vmatmul.mubr.f32.gmra.mxu0 %v871
        %v1090 = vpop.f32.mrf.mxu0
        %v1091 = vadd.f32 %v780, %v1090
        %v1092 = vpop.f32.mrf.mxu0
        %1093 = vmatprep.mubr.f32.mxu0 0.0
        %1094 = vmatmul.mubr.f32.gmra.mxu0 %v874
        %v1095 = vpop.f32.mrf.mxu0
        %v1096 = vadd.f32 %v780, %v1095
        %v1097 = vpop.f32.mrf.mxu0
        %1098 = vmatprep.mubr.f32.mxu0 0.0
        %1099 = vmatmul.mubr.f32.gmra.mxu0 %v877
        %v1100 = vpop.f32.mrf.mxu0
        %v1101 = vadd.f32 %v780, %v1100
        %v1102 = vpop.f32.mrf.mxu0
        %1103 = vdwg.mxu0
        %vm1104 = vcmp.ge.f32.partialorder %v946, 0.0
        %vm1105 = vcmp.ge.f32.partialorder %v951, 0.0
        %vm1106 = vcmp.ge.f32.partialorder %v956, 0.0
        %vm1107 = vcmp.ge.f32.partialorder %v961, 0.0
        %vm1108 = vcmp.ge.f32.partialorder %v966, 0.0
        %vm1109 = vcmp.ge.f32.partialorder %v971, 0.0
        %vm1110 = vcmp.ge.f32.partialorder %v976, 0.0
        %vm1111 = vcmp.ge.f32.partialorder %v981, 0.0
        %vm1112 = vcmp.ge.f32.partialorder %v986, 0.0
        %vm1113 = vcmp.ge.f32.partialorder %v991, 0.0
        %vm1114 = vcmp.ge.f32.partialorder %v996, 0.0
        %vm1115 = vcmp.ge.f32.partialorder %v1001, 0.0
        %vm1116 = vcmp.ge.f32.partialorder %v1006, 0.0
        %vm1117 = vcmp.ge.f32.partialorder %v1011, 0.0
        %vm1118 = vcmp.ge.f32.partialorder %v1016, 0.0
        %vm1119 = vcmp.ge.f32.partialorder %v1021, 0.0
        %vm1120 = vcmp.ge.f32.partialorder %v1026, 0.0
        %vm1121 = vcmp.ge.f32.partialorder %v1031, 0.0
        %vm1122 = vcmp.ge.f32.partialorder %v1036, 0.0
        %vm1123 = vcmp.ge.f32.partialorder %v1041, 0.0
        %vm1124 = vcmp.ge.f32.partialorder %v1046, 0.0
        %vm1125 = vcmp.ge.f32.partialorder %v1051, 0.0
        %vm1126 = vcmp.ge.f32.partialorder %v1056, 0.0
        %vm1127 = vcmp.ge.f32.partialorder %v1061, 0.0
        %vm1128 = vcmp.ge.f32.partialorder %v1066, 0.0
        %vm1129 = vcmp.ge.f32.partialorder %v1071, 0.0
        %vm1130 = vcmp.ge.f32.partialorder %v1076, 0.0
        %vm1131 = vcmp.ge.f32.partialorder %v1081, 0.0
        %vm1132 = vcmp.ge.f32.partialorder %v1086, 0.0
        %vm1133 = vcmp.ge.f32.partialorder %v1091, 0.0
        %vm1134 = vcmp.ge.f32.partialorder %v1096, 0.0
        %vm1135 = vcmp.ge.f32.partialorder %v1101, 0.0
        %v1136 = vmul.f32 %v946, 0.2
        %v1137 = vmul.f32 %v951, 0.2
        %v1138 = vmul.f32 %v956, 0.2
        %v1139 = vmul.f32 %v961, 0.2
        %v1140 = vmul.f32 %v966, 0.2
        %v1141 = vmul.f32 %v971, 0.2
        %v1142 = vmul.f32 %v976, 0.2
        %v1143 = vmul.f32 %v981, 0.2
        %v1144 = vmul.f32 %v986, 0.2
        %v1145 = vmul.f32 %v991, 0.2
        %v1146 = vmul.f32 %v996, 0.2
        %v1147 = vmul.f32 %v1001, 0.2
        %v1148 = vmul.f32 %v1006, 0.2
        %v1149 = vmul.f32 %v1011, 0.2
        %v1150 = vmul.f32 %v1016, 0.2
        %v1151 = vmul.f32 %v1021, 0.2
        %v1152 = vmul.f32 %v1026, 0.2
        %v1153 = vmul.f32 %v1031, 0.2
        %v1154 = vmul.f32 %v1036, 0.2
        %v1155 = vmul.f32 %v1041, 0.2
        %v1156 = vmul.f32 %v1046, 0.2
        %v1157 = vmul.f32 %v1051, 0.2
        %v1158 = vmul.f32 %v1056, 0.2
        %v1159 = vmul.f32 %v1061, 0.2
        %v1160 = vmul.f32 %v1066, 0.2
        %v1161 = vmul.f32 %v1071, 0.2
        %v1162 = vmul.f32 %v1076, 0.2
        %v1163 = vmul.f32 %v1081, 0.2
        %v1164 = vmul.f32 %v1086, 0.2
        %v1165 = vmul.f32 %v1091, 0.2
        %v1166 = vmul.f32 %v1096, 0.2
        %v1167 = vmul.f32 %v1101, 0.2
        %v1168 = vsel %vm1104, %v946, %v1136
        %v1169 = vsel %vm1105, %v951, %v1137
        %v1170 = vsel %vm1106, %v956, %v1138
        %v1171 = vsel %vm1107, %v961, %v1139
        %v1172 = vsel %vm1108, %v966, %v1140
        %v1173 = vsel %vm1109, %v971, %v1141
        %v1174 = vsel %vm1110, %v976, %v1142
        %v1175 = vsel %vm1111, %v981, %v1143
        %v1176 = vsel %vm1112, %v986, %v1144
        %v1177 = vsel %vm1113, %v991, %v1145
        %v1178 = vsel %vm1114, %v996, %v1146
        %v1179 = vsel %vm1115, %v1001, %v1147
        %v1180 = vsel %vm1116, %v1006, %v1148
        %v1181 = vsel %vm1117, %v1011, %v1149
        %v1182 = vsel %vm1118, %v1016, %v1150
        %v1183 = vsel %vm1119, %v1021, %v1151
        %v1184 = vsel %vm1120, %v1026, %v1152
        %v1185 = vsel %vm1121, %v1031, %v1153
        %v1186 = vsel %vm1122, %v1036, %v1154
        %v1187 = vsel %vm1123, %v1041, %v1155
        %v1188 = vsel %vm1124, %v1046, %v1156
        %v1189 = vsel %vm1125, %v1051, %v1157
        %v1190 = vsel %vm1126, %v1056, %v1158
        %v1191 = vsel %vm1127, %v1061, %v1159
        %v1192 = vsel %vm1128, %v1066, %v1160
        %v1193 = vsel %vm1129, %v1071, %v1161
        %v1194 = vsel %vm1130, %v1076, %v1162
        %v1195 = vsel %vm1131, %v1081, %v1163
        %v1196 = vsel %vm1132, %v1086, %v1164
        %v1197 = vsel %vm1133, %v1091, %v1165
        %v1198 = vsel %vm1134, %v1096, %v1166
        %v1199 = vsel %vm1135, %v1101, %v1167
        %v1200 = vmul.f32 %v1168, %v1168
        %v1201 = vmul.f32 %v1169, %v1169
        %v1202 = vmul.f32 %v1170, %v1170
        %v1203 = vmul.f32 %v1171, %v1171
        %v1204 = vmul.f32 %v1172, %v1172
        %v1205 = vmul.f32 %v1173, %v1173
        %v1206 = vmul.f32 %v1174, %v1174
        %v1207 = vmul.f32 %v1175, %v1175
        %v1208 = vmul.f32 %v1176, %v1176
        %v1209 = vmul.f32 %v1177, %v1177
        %v1210 = vmul.f32 %v1178, %v1178
        %v1211 = vmul.f32 %v1179, %v1179
        %v1212 = vmul.f32 %v1180, %v1180
        %v1213 = vmul.f32 %v1181, %v1181
        %v1214 = vmul.f32 %v1182, %v1182
        %v1215 = vmul.f32 %v1183, %v1183
        %v1216 = vmul.f32 %v1184, %v1184
        %v1217 = vmul.f32 %v1185, %v1185
        %v1218 = vmul.f32 %v1186, %v1186
        %v1219 = vmul.f32 %v1187, %v1187
        %v1220 = vmul.f32 %v1188, %v1188
        %v1221 = vmul.f32 %v1189, %v1189
        %v1222 = vmul.f32 %v1190, %v1190
        %v1223 = vmul.f32 %v1191, %v1191
        %v1224 = vmul.f32 %v1192, %v1192
        %v1225 = vmul.f32 %v1193, %v1193
        %v1226 = vmul.f32 %v1194, %v1194
        %v1227 = vmul.f32 %v1195, %v1195
        %v1228 = vmul.f32 %v1196, %v1196
        %v1229 = vmul.f32 %v1197, %v1197
        %v1230 = vmul.f32 %v1198, %v1198
        %v1231 = vmul.f32 %v1199, %v1199
        %v1232 = vsel %vm782, %v1200, 0.0
        %1233 = vadd.xlane.f32.xlu0 %v1232
        %v1234 = vpop.xlane.xlu0 %1233
        %v1235 = vsel %vm782, %v1201, 0.0
        %1236 = vadd.xlane.f32.xlu0 %v1235
        %v1237 = vpop.xlane.xlu0 %1236
        %v1238 = vsel %vm782, %v1202, 0.0
        %1239 = vadd.xlane.f32.xlu0 %v1238
        %v1240 = vpop.xlane.xlu0 %1239
        %v1241 = vsel %vm782, %v1203, 0.0
        %1242 = vadd.xlane.f32.xlu0 %v1241
        %v1243 = vpop.xlane.xlu0 %1242
        %v1244 = vsel %vm782, %v1204, 0.0
        %1245 = vadd.xlane.f32.xlu0 %v1244
        %v1246 = vpop.xlane.xlu0 %1245
        %v1247 = vsel %vm782, %v1205, 0.0
        %1248 = vadd.xlane.f32.xlu0 %v1247
        %v1249 = vpop.xlane.xlu0 %1248
        %v1250 = vsel %vm782, %v1206, 0.0
        %1251 = vadd.xlane.f32.xlu0 %v1250
        %v1252 = vpop.xlane.xlu0 %1251
        %v1253 = vsel %vm782, %v1207, 0.0
        %1254 = vadd.xlane.f32.xlu0 %v1253
        %v1255 = vpop.xlane.xlu0 %1254
        %v1256 = vsel %vm782, %v1208, 0.0
        %1257 = vadd.xlane.f32.xlu0 %v1256
        %v1258 = vpop.xlane.xlu0 %1257
        %v1259 = vsel %vm782, %v1209, 0.0
        %1260 = vadd.xlane.f32.xlu0 %v1259
        %v1261 = vpop.xlane.xlu0 %1260
        %v1262 = vsel %vm782, %v1210, 0.0
        %1263 = vadd.xlane.f32.xlu0 %v1262
        %v1264 = vpop.xlane.xlu0 %1263
        %v1265 = vsel %vm782, %v1211, 0.0
        %1266 = vadd.xlane.f32.xlu0 %v1265
        %v1267 = vpop.xlane.xlu0 %1266
        %v1268 = vsel %vm782, %v1212, 0.0
        %1269 = vadd.xlane.f32.xlu0 %v1268
        %v1270 = vpop.xlane.xlu0 %1269
        %v1271 = vsel %vm782, %v1213, 0.0
        %1272 = vadd.xlane.f32.xlu0 %v1271
        %v1273 = vpop.xlane.xlu0 %1272
        %v1274 = vsel %vm782, %v1214, 0.0
        %1275 = vadd.xlane.f32.xlu0 %v1274
        %v1276 = vpop.xlane.xlu0 %1275
        %v1277 = vsel %vm782, %v1215, 0.0
        %1278 = vadd.xlane.f32.xlu0 %v1277
        %v1279 = vpop.xlane.xlu0 %1278
        %v1280 = vsel %vm782, %v1216, 0.0
        %1281 = vadd.xlane.f32.xlu0 %v1280
        %v1282 = vpop.xlane.xlu0 %1281
        %v1283 = vsel %vm782, %v1217, 0.0
        %1284 = vadd.xlane.f32.xlu0 %v1283
        %v1285 = vpop.xlane.xlu0 %1284
        %v1286 = vsel %vm782, %v1218, 0.0
        %1287 = vadd.xlane.f32.xlu0 %v1286
        %v1288 = vpop.xlane.xlu0 %1287
        %v1289 = vsel %vm782, %v1219, 0.0
        %1290 = vadd.xlane.f32.xlu0 %v1289
        %v1291 = vpop.xlane.xlu0 %1290
        %v1292 = vsel %vm782, %v1220, 0.0
        %1293 = vadd.xlane.f32.xlu0 %v1292
        %v1294 = vpop.xlane.xlu0 %1293
        %v1295 = vsel %vm782, %v1221, 0.0
        %1296 = vadd.xlane.f32.xlu0 %v1295
        %v1297 = vpop.xlane.xlu0 %1296
        %v1298 = vsel %vm782, %v1222, 0.0
        %1299 = vadd.xlane.f32.xlu0 %v1298
        %v1300 = vpop.xlane.xlu0 %1299
        %v1301 = vsel %vm782, %v1223, 0.0
        %1302 = vadd.xlane.f32.xlu0 %v1301
        %v1303 = vpop.xlane.xlu0 %1302
        %v1304 = vsel %vm782, %v1224, 0.0
        %1305 = vadd.xlane.f32.xlu0 %v1304
        %v1306 = vpop.xlane.xlu0 %1305
        %v1307 = vsel %vm782, %v1225, 0.0
        %1308 = vadd.xlane.f32.xlu0 %v1307
        %v1309 = vpop.xlane.xlu0 %1308
        %v1310 = vsel %vm782, %v1226, 0.0
        %1311 = vadd.xlane.f32.xlu0 %v1310
        %v1312 = vpop.xlane.xlu0 %1311
        %v1313 = vsel %vm782, %v1227, 0.0
        %1314 = vadd.xlane.f32.xlu0 %v1313
        %v1315 = vpop.xlane.xlu0 %1314
        %v1316 = vsel %vm782, %v1228, 0.0
        %1317 = vadd.xlane.f32.xlu0 %v1316
        %v1318 = vpop.xlane.xlu0 %1317
        %v1319 = vsel %vm782, %v1229, 0.0
        %1320 = vadd.xlane.f32.xlu0 %v1319
        %v1321 = vpop.xlane.xlu0 %1320
        %v1322 = vsel %vm782, %v1230, 0.0
        %1323 = vadd.xlane.f32.xlu0 %v1322
        %v1324 = vpop.xlane.xlu0 %1323
        %v1325 = vsel %vm782, %v1231, 0.0
        %1326 = vadd.xlane.f32.xlu0 %v1325
        %v1327 = vpop.xlane.xlu0 %1326
        %v1328 = vmax.f32 %v1234, 1e-24
        %v1329 = vmax.f32 %v1237, 1e-24
        %v1330 = vmax.f32 %v1240, 1e-24
        %v1331 = vmax.f32 %v1243, 1e-24
        %v1332 = vmax.f32 %v1246, 1e-24
        %v1333 = vmax.f32 %v1249, 1e-24
        %v1334 = vmax.f32 %v1252, 1e-24
        %v1335 = vmax.f32 %v1255, 1e-24
        %v1336 = vmax.f32 %v1258, 1e-24
        %v1337 = vmax.f32 %v1261, 1e-24
        %v1338 = vmax.f32 %v1264, 1e-24
        %v1339 = vmax.f32 %v1267, 1e-24
        %v1340 = vmax.f32 %v1270, 1e-24
        %v1341 = vmax.f32 %v1273, 1e-24
        %v1342 = vmax.f32 %v1276, 1e-24
        %v1343 = vmax.f32 %v1279, 1e-24
        %v1344 = vmax.f32 %v1282, 1e-24
        %v1345 = vmax.f32 %v1285, 1e-24
        %v1346 = vmax.f32 %v1288, 1e-24
        %v1347 = vmax.f32 %v1291, 1e-24
        %v1348 = vmax.f32 %v1294, 1e-24
        %v1349 = vmax.f32 %v1297, 1e-24
        %v1350 = vmax.f32 %v1300, 1e-24
        %v1351 = vmax.f32 %v1303, 1e-24
        %v1352 = vmax.f32 %v1306, 1e-24
        %v1353 = vmax.f32 %v1309, 1e-24
        %v1354 = vmax.f32 %v1312, 1e-24
        %v1355 = vmax.f32 %v1315, 1e-24
        %v1356 = vmax.f32 %v1318, 1e-24
        %v1357 = vmax.f32 %v1321, 1e-24
        %v1358 = vmax.f32 %v1324, 1e-24
        %v1359 = vmax.f32 %v1327, 1e-24
        %v1360 = vrsqrt.pop %v1328
        %v1361 = vrsqrt.pop %v1329
        %v1362 = vrsqrt.pop %v1330
        %v1363 = vrsqrt.pop %v1331
        %v1364 = vrsqrt.pop %v1332
        %v1365 = vrsqrt.pop %v1333
        %v1366 = vrsqrt.pop %v1334
        %v1367 = vrsqrt.pop %v1335
        %v1368 = vrsqrt.pop %v1336
        %v1369 = vrsqrt.pop %v1337
        %v1370 = vrsqrt.pop %v1338
        %v1371 = vrsqrt.pop %v1339
        %v1372 = vrsqrt.pop %v1340
        %v1373 = vrsqrt.pop %v1341
        %v1374 = vrsqrt.pop %v1342
        %v1375 = vrsqrt.pop %v1343
        %v1376 = vrsqrt.pop %v1344
        %v1377 = vrsqrt.pop %v1345
        %v1378 = vrsqrt.pop %v1346
        %v1379 = vrsqrt.pop %v1347
        %v1380 = vrsqrt.pop %v1348
        %v1381 = vrsqrt.pop %v1349
        %v1382 = vrsqrt.pop %v1350
        %v1383 = vrsqrt.pop %v1351
        %v1384 = vrsqrt.pop %v1352
        %v1385 = vrsqrt.pop %v1353
        %v1386 = vrsqrt.pop %v1354
        %v1387 = vrsqrt.pop %v1355
        %v1388 = vrsqrt.pop %v1356
        %v1389 = vrsqrt.pop %v1357
        %v1390 = vrsqrt.pop %v1358
        %v1391 = vrsqrt.pop %v1359
        %v1392 = vmul.f32 %v1168, %v1360
        %v1393 = vmul.f32 %v1169, %v1361
        %v1394 = vmul.f32 %v1170, %v1362
        %v1395 = vmul.f32 %v1171, %v1363
        %v1396 = vmul.f32 %v1172, %v1364
        %v1397 = vmul.f32 %v1173, %v1365
        %v1398 = vmul.f32 %v1174, %v1366
        %v1399 = vmul.f32 %v1175, %v1367
        %v1400 = vmul.f32 %v1176, %v1368
        %v1401 = vmul.f32 %v1177, %v1369
        %v1402 = vmul.f32 %v1178, %v1370
        %v1403 = vmul.f32 %v1179, %v1371
        %v1404 = vmul.f32 %v1180, %v1372
        %v1405 = vmul.f32 %v1181, %v1373
        %v1406 = vmul.f32 %v1182, %v1374
        %v1407 = vmul.f32 %v1183, %v1375
        %v1408 = vmul.f32 %v1184, %v1376
        %v1409 = vmul.f32 %v1185, %v1377
        %v1410 = vmul.f32 %v1186, %v1378
        %v1411 = vmul.f32 %v1187, %v1379
        %v1412 = vmul.f32 %v1188, %v1380
        %v1413 = vmul.f32 %v1189, %v1381
        %v1414 = vmul.f32 %v1190, %v1382
        %v1415 = vmul.f32 %v1191, %v1383
        %v1416 = vmul.f32 %v1192, %v1384
        %v1417 = vmul.f32 %v1193, %v1385
        %v1418 = vmul.f32 %v1194, %v1386
        %v1419 = vmul.f32 %v1195, %v1387
        %v1420 = vmul.f32 %v1196, %v1388
        %v1421 = vmul.f32 %v1197, %v1389
        %v1422 = vmul.f32 %v1198, %v1390
        %v1423 = vmul.f32 %v1199, %v1391
        %1424 = vst.msk [vmem:[#allocation2] sm:$0xff] %vm782, %v1392
        %1425 = vst.msk [vmem:[#allocation2 + $0x8] sm:$0xff] %vm782, %v1393
        %1426 = vst.msk [vmem:[#allocation2 + $0x10] sm:$0xff] %vm782, %v1394
        %1427 = vst.msk [vmem:[#allocation2 + $0x18] sm:$0xff] %vm782, %v1395
        %1428 = vst.msk [vmem:[#allocation2 + $0x20] sm:$0xff] %vm782, %v1396
        %1429 = vst.msk [vmem:[#allocation2 + $0x28] sm:$0xff] %vm782, %v1397
        %1430 = vst.msk [vmem:[#allocation2 + $0x30] sm:$0xff] %vm782, %v1398
        %1431 = vst.msk [vmem:[#allocation2 + $0x38] sm:$0xff] %vm782, %v1399
        %1432 = vst.msk [vmem:[#allocation2 + $0x40] sm:$0xff] %vm782, %v1400
        %1433 = vst.msk [vmem:[#allocation2 + $0x48] sm:$0xff] %vm782, %v1401
        %1434 = vst.msk [vmem:[#allocation2 + $0x50] sm:$0xff] %vm782, %v1402
        %1435 = vst.msk [vmem:[#allocation2 + $0x58] sm:$0xff] %vm782, %v1403
        %1436 = vst.msk [vmem:[#allocation2 + $0x60] sm:$0xff] %vm782, %v1404
        %1437 = vst.msk [vmem:[#allocation2 + $0x68] sm:$0xff] %vm782, %v1405
        %1438 = vst.msk [vmem:[#allocation2 + $0x70] sm:$0xff] %vm782, %v1406
        %1439 = vst.msk [vmem:[#allocation2 + $0x78] sm:$0xff] %vm782, %v1407
        %1440 = vst.msk [vmem:[#allocation2 + $0x80] sm:$0xff] %vm782, %v1408
        %1441 = vst.msk [vmem:[#allocation2 + $0x88] sm:$0xff] %vm782, %v1409
        %1442 = vst.msk [vmem:[#allocation2 + $0x90] sm:$0xff] %vm782, %v1410
        %1443 = vst.msk [vmem:[#allocation2 + $0x98] sm:$0xff] %vm782, %v1411
        %1444 = vst.msk [vmem:[#allocation2 + $0xa0] sm:$0xff] %vm782, %v1412
        %1445 = vst.msk [vmem:[#allocation2 + $0xa8] sm:$0xff] %vm782, %v1413
        %1446 = vst.msk [vmem:[#allocation2 + $0xb0] sm:$0xff] %vm782, %v1414
        %1447 = vst.msk [vmem:[#allocation2 + $0xb8] sm:$0xff] %vm782, %v1415
        %1448 = vst.msk [vmem:[#allocation2 + $0xc0] sm:$0xff] %vm782, %v1416
        %1449 = vst.msk [vmem:[#allocation2 + $0xc8] sm:$0xff] %vm782, %v1417
        %1450 = vst.msk [vmem:[#allocation2 + $0xd0] sm:$0xff] %vm782, %v1418
        %1451 = vst.msk [vmem:[#allocation2 + $0xd8] sm:$0xff] %vm782, %v1419
        %1452 = vst.msk [vmem:[#allocation2 + $0xe0] sm:$0xff] %vm782, %v1420
        %1453 = vst.msk [vmem:[#allocation2 + $0xe8] sm:$0xff] %vm782, %v1421
        %1454 = vst.msk [vmem:[#allocation2 + $0xf0] sm:$0xff] %vm782, %v1422
        %1455 = vst.msk [vmem:[#allocation2 + $0xf8] sm:$0xff] %vm782, %v1423
        %1456 = vst.msk [vmem:[%s231] sm:$0xff] %vm782, %v1392
        %1457 = vst.msk [vmem:[%s231 + $0x8] sm:$0xff] %vm782, %v1393
        %1458 = vst.msk [vmem:[%s231 + $0x10] sm:$0xff] %vm782, %v1394
        %1459 = vst.msk [vmem:[%s231 + $0x18] sm:$0xff] %vm782, %v1395
        %1460 = vst.msk [vmem:[%s231 + $0x20] sm:$0xff] %vm782, %v1396
        %1461 = vst.msk [vmem:[%s231 + $0x28] sm:$0xff] %vm782, %v1397
        %1462 = vst.msk [vmem:[%s231 + $0x30] sm:$0xff] %vm782, %v1398
        %1463 = vst.msk [vmem:[%s231 + $0x38] sm:$0xff] %vm782, %v1399
        %1464 = vst.msk [vmem:[%s231 + $0x40] sm:$0xff] %vm782, %v1400
        %1465 = vst.msk [vmem:[%s231 + $0x48] sm:$0xff] %vm782, %v1401
        %1466 = vst.msk [vmem:[%s231 + $0x50] sm:$0xff] %vm782, %v1402
        %1467 = vst.msk [vmem:[%s231 + $0x58] sm:$0xff] %vm782, %v1403
        %1468 = vst.msk [vmem:[%s231 + $0x60] sm:$0xff] %vm782, %v1404
        %1469 = vst.msk [vmem:[%s231 + $0x68] sm:$0xff] %vm782, %v1405
        %1470 = vst.msk [vmem:[%s231 + $0x70] sm:$0xff] %vm782, %v1406
        %1471 = vst.msk [vmem:[%s231 + $0x78] sm:$0xff] %vm782, %v1407
        %1472 = vst.msk [vmem:[%s231 + $0x80] sm:$0xff] %vm782, %v1408
        %1473 = vst.msk [vmem:[%s231 + $0x88] sm:$0xff] %vm782, %v1409
        %1474 = vst.msk [vmem:[%s231 + $0x90] sm:$0xff] %vm782, %v1410
        %1475 = vst.msk [vmem:[%s231 + $0x98] sm:$0xff] %vm782, %v1411
        %1476 = vst.msk [vmem:[%s231 + $0xa0] sm:$0xff] %vm782, %v1412
        %1477 = vst.msk [vmem:[%s231 + $0xa8] sm:$0xff] %vm782, %v1413
        %1478 = vst.msk [vmem:[%s231 + $0xb0] sm:$0xff] %vm782, %v1414
        %1479 = vst.msk [vmem:[%s231 + $0xb8] sm:$0xff] %vm782, %v1415
        %1480 = vst.msk [vmem:[%s231 + $0xc0] sm:$0xff] %vm782, %v1416
        %1481 = vst.msk [vmem:[%s231 + $0xc8] sm:$0xff] %vm782, %v1417
        %1482 = vst.msk [vmem:[%s231 + $0xd0] sm:$0xff] %vm782, %v1418
        %1483 = vst.msk [vmem:[%s231 + $0xd8] sm:$0xff] %vm782, %v1419
        %1484 = vst.msk [vmem:[%s231 + $0xe0] sm:$0xff] %vm782, %v1420
        %1485 = vst.msk [vmem:[%s231 + $0xe8] sm:$0xff] %vm782, %v1421
        %1486 = vst.msk [vmem:[%s231 + $0xf0] sm:$0xff] %vm782, %v1422
        %1487 = vst.msk [vmem:[%s231 + $0xf8] sm:$0xff] %vm782, %v1423
        %p1488 = scmp.lt.s32.totalorder %s18, 2
        %s1489 = scalar_select %p1488, %s18, 2
        %s1490 = smul.addr %s1489, 32
        %s1491 = smul.addr %s1490, 8
        %s1492 = scalar_lea.vmem %s4, %s1491
        // Predicated region
        $region45: #{tpu_custom_call.1} parent=35 // pred_check
          %p1493 = pneg %p130
        $region46: #{tpu_custom_call.1} parent=35 // pred_check_branch
          %1495 = sbr.rel (%p1493) target = $region48
        $region47: #{tpu_custom_call.1} parent=35 // pred_region
          _
        $region48: #{tpu_custom_call.1} parent=35 // pred_fallthru
          _
      $region36: #{tpu_custom_call.1} parent=5 // pred_fallthru
        _
      %p1496 = scmp.le.s32.totalorder 2, %s13
      // Predicated region
      $region49: #{tpu_custom_call.1} parent=5 // pred_check
        %p1497 = pneg %p1496
      $region50: #{tpu_custom_call.1} parent=5 // pred_check_branch
        %1499 = sbr.rel (%p1497) target = $region52
      $region51: #{tpu_custom_call.1} parent=5 // pred_region
        %s1500 = ssub.s32 %s13, 2
        // Predicated region
        $region53: #{tpu_custom_call.1} parent=51 // pred_check
          %p1501 = pneg %p136
        $region54: #{tpu_custom_call.1} parent=51 // pred_check_branch
          %1503 = sbr.rel (%p1501) target = $region56
        $region55: #{tpu_custom_call.1} parent=51 // pred_region
          %p1504 = scmp.lt.s32.totalorder %s19, 2
          %s1505 = scalar_select %p1504, %s19, 2
          %s1506 = smul.addr %s1505, 32
          %s1507 = smul.addr %s1506, 8
          %s1508 = scalar_lea.vmem %s4, %s1507
        $region56: #{tpu_custom_call.1} parent=51 // pred_fallthru
          _
      $region52: #{tpu_custom_call.1} parent=5 // pred_fallthru
        _
    $region6: #{tpu_custom_call.1} parent=1 // loop_footer
      %s17 = sadd.s32 1, %s13
    $region7: #{tpu_custom_call.1} parent=1 // loop_footer_branch
      %12 = sbr.rel target = $region3
    $region8: #{tpu_custom_call.1} parent=1 // loop_exit
      _
    %1509 = vsyncpa [#allocation4], 1
    %s1510 = scalar_lea.sflag [#allocation4], 1
    %1511 = vsyncpa %s1510, 1

</llo_original>
